<compile_context>
chip_gen: v7x
topology: tpu7x:2x2x1
jax: 0.10.0
libtpu: 0.0.40
codegen_flags: <defaults>
</compile_context>

<pallas_src>
import functools

import jax
import jax.numpy as jnp
import numpy as np
from jax.experimental import pallas as pl
from jax.experimental.pallas import tpu as pltpu

_LANE = 128              # lane-dense output padding
_MAX_BLOCK_BATCH = 512   # sweepable; ~8 MiB live VMEM per grid step at T=8


def fsa_kernel(x_ref, we_ref, be_ref, sp2_ref, m_ref, sa_ref, out_ref, *, inv_n):
    """One batch block of the full forward pass.

    x_ref:   (TB, T, I)    input block, batch-major, straight from HBM
    we_ref:  (I, S*N)      expanded Linear weight  (W^T @ E)
    be_ref:  (1, S*N)      expanded Linear bias    (b @ E)
    sp2_ref: (1, S*N)      start distribution pushed through P:  start @ P2
    m_ref:   (S*N, S*N)    expanded transition matrix  M = Sel @ P2
    sa_ref:  (S*N, CP)     Sel @ accept, zero-padded to CP (=128) lanes
    out_ref: (TB, CP)      lane-dense class probabilities (first C lanes valid)
    """
    T = x_ref.shape[1]

    xall = x_ref[...]            # (TB, T, I)
    we = we_ref[...]
    be = be_ref[...]
    sp2 = sp2_ref[...]
    mmat = m_ref[...]

    u = None
    # Static unroll: T is small & static.  The per-step Linear/softmax does not depend on
    # the carried state, so the scheduler overlaps it with the serial u @ M matmul chain.
    # TODO(synk): switch to lax.fori_loop(..., unroll=True) if T grows past ~16.
    for t in range(T):
        xt = xall[:, t, :]                                               # (TB, I)
        logits = jnp.dot(xt, we, preferred_element_type=jnp.float32) + be  # (TB, S*N)
        ex = jnp.exp(logits - jnp.max(logits, axis=-1, keepdims=True))
        # Each symbol's exp is repeated N times along lanes -> scale the row sum by 1/N.
        inv = pl.reciprocal(jnp.sum(ex, axis=-1, keepdims=True) * inv_n, approx=True)
        sym = ex * inv                                                   # (TB, S*N)
        if t == 0:
            u = sp2 * sym                                                # (TB, S*N)
        else:
            u = jnp.dot(u, mmat, preferred_element_type=jnp.float32) * sym
    # class_probs = state_probs @ accept  ==  u_{T-1} @ (Sel @ accept)
    out_ref[...] = jnp.dot(u, sa_ref[...],
                           preferred_element_type=jnp.float32).astype(out_ref.dtype)


def prepare_params(w, b, P, start, accept):
    """Fold all fixed parameters into kernel-ready tensors (cache per model instance)."""
    S, _ = w.shape            # num_symbols, input_size
    N = P.shape[1]            # num_states
    C = accept.shape[1]       # num_classes
    SN = S * N
    f32 = jnp.float32

    w_t = jnp.transpose(w.astype(f32))                        # (I, S)
    we = jnp.repeat(w_t, N, axis=1)                           # (I, S*N)  = W^T @ E
    be = jnp.repeat(b.astype(f32), N).reshape(1, SN)          # (1, S*N)  = b @ E
    p2 = jnp.transpose(P.astype(f32), (1, 0, 2)).reshape(N, SN)   # P2[n, s*N+m] = P[s,n,m]
    sp2 = jnp.dot(start.astype(f32).reshape(1, N), p2)        # (1, S*N)
    m = jnp.tile(p2, (S, 1))                                  # (S*N, S*N) = Sel @ P2
    sa = jnp.tile(accept.astype(f32), (S, 1))                 # (S*N, C)   = Sel @ accept
    cp = ((max(C, 1) + _LANE - 1) // _LANE) * _LANE
    sa = jnp.pad(sa, ((0, 0), (0, cp - C)))                   # lane-dense epilogue
    return we, be, sp2, m, sa


@functools.partial(jax.jit, static_argnames=("num_states", "num_classes"))
def fsa_forward(x, we, be, sp2, m, sa, *, num_states, num_classes):
    """x: (B, T, I); parameter tensors from prepare_params()."""
    B, T, I = x.shape
    SN = m.shape[0]
    CP = sa.shape[1]

    # Batch tiling: pad only the remainder to the f32 sublane granularity / tile multiple,
    # tile up to _MAX_BLOCK_BATCH rows, and split into >=2 grid steps when the batch allows
    # it so v7x's second TensorCore gets balanced work (one extra step is noise on v5e/v6e).
    B8 = ((B + 7) // 8) * 8
    TB = min(_MAX_BLOCK_BATCH, B8)
    if TB == B8 and B8 >= 16 and (B8 // 2) % 8 == 0:
        TB = B8 // 2
    B_pad = ((B8 + TB - 1) // TB) * TB
    if B_pad != B:
        # Zero rows -> uniform softmax -> finite garbage, discarded by the final slice.
        x = jnp.pad(x, ((0, B_pad - B), (0, 0), (0, 0)))

    kernel = functools.partial(fsa_kernel, inv_n=1.0 / num_states)
    out = pl.pallas_call(
        kernel,
        out_shape=jax.ShapeDtypeStruct((B_pad, CP), jnp.float32),
        grid_spec=pltpu.PrefetchScalarGridSpec(
            num_scalar_prefetch=0,
            grid=(B_pad // TB,),
            in_specs=[
                pl.BlockSpec((TB, T, I), lambda i: (i, 0, 0)),
                pl.BlockSpec((I, SN), lambda i: (0, 0)),
                pl.BlockSpec((1, SN), lambda i: (0, 0)),
                pl.BlockSpec((1, SN), lambda i: (0, 0)),
                pl.BlockSpec((SN, SN), lambda i: (0, 0)),
                pl.BlockSpec((SN, CP), lambda i: (0, 0)),
            ],
            out_specs=pl.BlockSpec((TB, CP), lambda i: (i, 0)),
        ),
        compiler_params=pltpu.CompilerParams(
            dimension_semantics=("parallel",),
            vmem_limit_bytes=32 * 1024 * 1024),
    )(x, we, be, sp2, m, sa)
    return out[:B, :num_classes]


def discretize_and_classify(x, w, b, P, start, accept):
    """One-shot convenience wrapper (for repeated calls, cache prepare_params())."""
    params = prepare_params(w, b, P, start, accept)
    return fsa_forward(x, *params, num_states=P.shape[1], num_classes=accept.shape[1])


def reference(x, w, b, P, start, accept):
    """Plain-JAX reproduction of the PyTorch forward (with the intended final einsum)."""
    logits = jnp.einsum('bti,oi->bto', x, w) + b
    sym = jax.nn.softmax(logits, axis=2)
    Bsz = x.shape[0]
    state = jnp.broadcast_to(start[None, :], (Bsz, start.shape[0]))
    for t in range(x.shape[1]):
        weighted = jnp.einsum('bs,snm->bnm', sym[:, t, :], P)
        state = jnp.einsum('bn,bnm->bm', state, weighted)
    return jnp.einsum('bn,nc->bc', state, accept)


def init_params(key, input_size, num_symbols, num_states, num_classes):
    k1, k2, k3, k4, k5 = jax.random.split(key, 5)
    # nn.Linear(input_size, num_symbols): weight (out, in), bias (out,)
    bound = 1.0 / np.sqrt(input_size)
    w = jax.random.uniform(k1, (num_symbols, input_size), jnp.float32, -bound, bound)
    b = jax.random.uniform(k2, (num_symbols,), jnp.float32, -bound, bound)
    # NeuralAutomaton parameters
    P = jax.nn.softmax(jax.random.normal(k3, (num_symbols, num_states, num_states),
                                         jnp.float32), axis=2)
    start = jax.nn.softmax(jax.random.normal(k4, (num_states,), jnp.float32), axis=0)
    accept = jax.nn.softmax(jax.random.normal(k5, (num_states, num_classes),
                                              jnp.float32), axis=1)
    return w, b, P, start, accept


if __name__ == "__main__":
    num_classes = 2
    num_states = 10
    num_symbols = 10
    input_size = 16
    batch = 2
    seq_len = 8

    key = jax.random.PRNGKey(0)
    k_params, k_x = jax.random.split(key)
    w, b, P, start, accept = init_params(k_params, input_size, num_symbols,
                                         num_states, num_classes)
    x = jax.random.normal(k_x, (batch, seq_len, input_size), jnp.float32)

    params = prepare_params(w, b, P, start, accept)       # folded once, reused per call
    out = fsa_forward(x, *params, num_states=num_states, num_classes=num_classes)
    out = jax.block_until_ready(out)

    ref = reference(x, w, b, P, start, accept)
    # Slightly relaxed tolerance: softmax denominator uses the EUP approximate reciprocal,
    # whose error compounds multiplicatively over the T automaton steps.
    np.testing.assert_allclose(np.asarray(out), np.asarray(ref), rtol=3e-3, atol=1.5e-3)

    print("KERNEL_OK")
</pallas_src>

<mosaic_0001>
module attributes {stable_mosaic.version = 11 : i64} {
  func.func @fsa_kernel(%arg0: i32, %arg1: memref<8x8x16xf32, #tpu.memory_space<vmem>>, %arg2: memref<16x100xf32, #tpu.memory_space<vmem>>, %arg3: memref<1x100xf32, #tpu.memory_space<vmem>>, %arg4: memref<1x100xf32, #tpu.memory_space<vmem>>, %arg5: memref<100x100xf32, #tpu.memory_space<vmem>>, %arg6: memref<100x128xf32, #tpu.memory_space<vmem>>, %arg7: memref<8x128xf32, #tpu.memory_space<vmem>>) attributes {dimension_semantics = [#tpu.dimension_semantics<parallel>], iteration_bounds = array<i64: 1>, scalar_prefetch = 0 : i64, scratch_operands = 0 : i64, tpu.core_type = #tpu.core_type<tc>, window_params = [{transform_indices = @transform_0, window_bounds = array<i64: 8, 8, 16>}, {pipeline_mode = #tpu.pipeline_mode<synchronous>, transform_indices = @transform_1, window_bounds = array<i64: 16, 100>}, {pipeline_mode = #tpu.pipeline_mode<synchronous>, transform_indices = @transform_2, window_bounds = array<i64: 1, 100>}, {pipeline_mode = #tpu.pipeline_mode<synchronous>, transform_indices = @transform_3, window_bounds = array<i64: 1, 100>}, {pipeline_mode = #tpu.pipeline_mode<synchronous>, transform_indices = @transform_4, window_bounds = array<i64: 100, 100>}, {pipeline_mode = #tpu.pipeline_mode<synchronous>, transform_indices = @transform_5, window_bounds = array<i64: 100, 128>}, {transform_indices = @transform_6, window_bounds = array<i64: 8, 128>}]} {
    %c0 = arith.constant 0 : index
    %c0_0 = arith.constant 0 : index
    %c0_1 = arith.constant 0 : index
    %0 = vector.load %arg1[%c0, %c0_0, %c0_1] : memref<8x8x16xf32, #tpu.memory_space<vmem>>, vector<8x8x16xf32>
    %c0_2 = arith.constant 0 : index
    %c0_3 = arith.constant 0 : index
    %1 = vector.load %arg2[%c0_2, %c0_3] : memref<16x100xf32, #tpu.memory_space<vmem>>, vector<16x100xf32>
    %c0_4 = arith.constant 0 : index
    %c0_5 = arith.constant 0 : index
    %2 = vector.load %arg3[%c0_4, %c0_5] : memref<1x100xf32, #tpu.memory_space<vmem>>, vector<1x100xf32>
    %c0_6 = arith.constant 0 : index
    %c0_7 = arith.constant 0 : index
    %3 = vector.load %arg4[%c0_6, %c0_7] : memref<1x100xf32, #tpu.memory_space<vmem>>, vector<1x100xf32>
    %c0_8 = arith.constant 0 : index
    %c0_9 = arith.constant 0 : index
    %4 = vector.load %arg5[%c0_8, %c0_9] : memref<100x100xf32, #tpu.memory_space<vmem>>, vector<100x100xf32>
    %5 = vector.extract_strided_slice %0 {offsets = [0, 0, 0], sizes = [8, 1, 16], strides = [1, 1, 1]} : vector<8x8x16xf32> to vector<8x1x16xf32>
    %6 = vector.shape_cast %5 : vector<8x1x16xf32> to vector<8x16xf32>
    %cst = arith.constant dense<0.000000e+00> : vector<8x100xf32>
    %7 = tpu.matmul %6, %1, %cst {dimension_numbers = #tpu.dot_dimension_numbers<[1], [0], [0], [1], [0, 0, 1, 1], [], []>} : vector<8x16xf32>, vector<16x100xf32>, vector<8x100xf32> -> vector<8x100xf32>
    %8 = vector.broadcast %2 : vector<1x100xf32> to vector<8x100xf32>
    %9 = arith.addf %7, %8 : vector<8x100xf32>
    %cst_10 = arith.constant dense<0xFF800000> : vector<8xf32>
    %10 = vector.multi_reduction <maximumf>, %9, %cst_10 [1] : vector<8x100xf32> to vector<8xf32>
    %11 = vector.shape_cast %10 : vector<8xf32> to vector<8x1xf32>
    %12 = vector.broadcast %11 : vector<8x1xf32> to vector<8x100xf32>
    %13 = arith.subf %9, %12 : vector<8x100xf32>
    %14 = math.exp %13 : vector<8x100xf32>
    %cst_11 = arith.constant dense<0.000000e+00> : vector<8xf32>
    %15 = vector.multi_reduction <add>, %14, %cst_11 [1] : vector<8x100xf32> to vector<8xf32>
    %16 = vector.shape_cast %15 : vector<8xf32> to vector<8x1xf32>
    %cst_12 = arith.constant 1.000000e-01 : f32
    %17 = vector.broadcast %cst_12 : f32 to vector<8x1xf32>
    %18 = arith.mulf %16, %17 : vector<8x1xf32>
    %19 = tpu.reciprocal %18 {approx = true} : vector<8x1xf32> -> vector<8x1xf32>
    %20 = vector.broadcast %19 : vector<8x1xf32> to vector<8x100xf32>
    %21 = arith.mulf %14, %20 : vector<8x100xf32>
    %22 = vector.broadcast %3 : vector<1x100xf32> to vector<8x100xf32>
    %23 = arith.mulf %22, %21 : vector<8x100xf32>
    %24 = vector.extract_strided_slice %0 {offsets = [0, 1, 0], sizes = [8, 1, 16], strides = [1, 1, 1]} : vector<8x8x16xf32> to vector<8x1x16xf32>
    %25 = vector.shape_cast %24 : vector<8x1x16xf32> to vector<8x16xf32>
    %cst_13 = arith.constant dense<0.000000e+00> : vector<8x100xf32>
    %26 = tpu.matmul %25, %1, %cst_13 {dimension_numbers = #tpu.dot_dimension_numbers<[1], [0], [0], [1], [0, 0, 1, 1], [], []>} : vector<8x16xf32>, vector<16x100xf32>, vector<8x100xf32> -> vector<8x100xf32>
    %27 = vector.broadcast %2 : vector<1x100xf32> to vector<8x100xf32>
    %28 = arith.addf %26, %27 : vector<8x100xf32>
    %cst_14 = arith.constant dense<0xFF800000> : vector<8xf32>
    %29 = vector.multi_reduction <maximumf>, %28, %cst_14 [1] : vector<8x100xf32> to vector<8xf32>
    %30 = vector.shape_cast %29 : vector<8xf32> to vector<8x1xf32>
    %31 = vector.broadcast %30 : vector<8x1xf32> to vector<8x100xf32>
    %32 = arith.subf %28, %31 : vector<8x100xf32>
    %33 = math.exp %32 : vector<8x100xf32>
    %cst_15 = arith.constant dense<0.000000e+00> : vector<8xf32>
    %34 = vector.multi_reduction <add>, %33, %cst_15 [1] : vector<8x100xf32> to vector<8xf32>
    %35 = vector.shape_cast %34 : vector<8xf32> to vector<8x1xf32>
    %cst_16 = arith.constant 1.000000e-01 : f32
    %36 = vector.broadcast %cst_16 : f32 to vector<8x1xf32>
    %37 = arith.mulf %35, %36 : vector<8x1xf32>
    %38 = tpu.reciprocal %37 {approx = true} : vector<8x1xf32> -> vector<8x1xf32>
    %39 = vector.broadcast %38 : vector<8x1xf32> to vector<8x100xf32>
    %40 = arith.mulf %33, %39 : vector<8x100xf32>
    %cst_17 = arith.constant dense<0.000000e+00> : vector<8x100xf32>
    %41 = tpu.matmul %23, %4, %cst_17 {dimension_numbers = #tpu.dot_dimension_numbers<[1], [0], [0], [1], [0, 0, 1, 1], [], []>} : vector<8x100xf32>, vector<100x100xf32>, vector<8x100xf32> -> vector<8x100xf32>
    %42 = arith.mulf %41, %40 : vector<8x100xf32>
    %43 = vector.extract_strided_slice %0 {offsets = [0, 2, 0], sizes = [8, 1, 16], strides = [1, 1, 1]} : vector<8x8x16xf32> to vector<8x1x16xf32>
    %44 = vector.shape_cast %43 : vector<8x1x16xf32> to vector<8x16xf32>
    %cst_18 = arith.constant dense<0.000000e+00> : vector<8x100xf32>
    %45 = tpu.matmul %44, %1, %cst_18 {dimension_numbers = #tpu.dot_dimension_numbers<[1], [0], [0], [1], [0, 0, 1, 1], [], []>} : vector<8x16xf32>, vector<16x100xf32>, vector<8x100xf32> -> vector<8x100xf32>
    %46 = vector.broadcast %2 : vector<1x100xf32> to vector<8x100xf32>
    %47 = arith.addf %45, %46 : vector<8x100xf32>
    %cst_19 = arith.constant dense<0xFF800000> : vector<8xf32>
    %48 = vector.multi_reduction <maximumf>, %47, %cst_19 [1] : vector<8x100xf32> to vector<8xf32>
    %49 = vector.shape_cast %48 : vector<8xf32> to vector<8x1xf32>
    %50 = vector.broadcast %49 : vector<8x1xf32> to vector<8x100xf32>
    %51 = arith.subf %47, %50 : vector<8x100xf32>
    %52 = math.exp %51 : vector<8x100xf32>
    %cst_20 = arith.constant dense<0.000000e+00> : vector<8xf32>
    %53 = vector.multi_reduction <add>, %52, %cst_20 [1] : vector<8x100xf32> to vector<8xf32>
    %54 = vector.shape_cast %53 : vector<8xf32> to vector<8x1xf32>
    %cst_21 = arith.constant 1.000000e-01 : f32
    %55 = vector.broadcast %cst_21 : f32 to vector<8x1xf32>
    %56 = arith.mulf %54, %55 : vector<8x1xf32>
    %57 = tpu.reciprocal %56 {approx = true} : vector<8x1xf32> -> vector<8x1xf32>
    %58 = vector.broadcast %57 : vector<8x1xf32> to vector<8x100xf32>
    %59 = arith.mulf %52, %58 : vector<8x100xf32>
    %cst_22 = arith.constant dense<0.000000e+00> : vector<8x100xf32>
    %60 = tpu.matmul %42, %4, %cst_22 {dimension_numbers = #tpu.dot_dimension_numbers<[1], [0], [0], [1], [0, 0, 1, 1], [], []>} : vector<8x100xf32>, vector<100x100xf32>, vector<8x100xf32> -> vector<8x100xf32>
    %61 = arith.mulf %60, %59 : vector<8x100xf32>
    %62 = vector.extract_strided_slice %0 {offsets = [0, 3, 0], sizes = [8, 1, 16], strides = [1, 1, 1]} : vector<8x8x16xf32> to vector<8x1x16xf32>
    %63 = vector.shape_cast %62 : vector<8x1x16xf32> to vector<8x16xf32>
    %cst_23 = arith.constant dense<0.000000e+00> : vector<8x100xf32>
    %64 = tpu.matmul %63, %1, %cst_23 {dimension_numbers = #tpu.dot_dimension_numbers<[1], [0], [0], [1], [0, 0, 1, 1], [], []>} : vector<8x16xf32>, vector<16x100xf32>, vector<8x100xf32> -> vector<8x100xf32>
    %65 = vector.broadcast %2 : vector<1x100xf32> to vector<8x100xf32>
    %66 = arith.addf %64, %65 : vector<8x100xf32>
    %cst_24 = arith.constant dense<0xFF800000> : vector<8xf32>
    %67 = vector.multi_reduction <maximumf>, %66, %cst_24 [1] : vector<8x100xf32> to vector<8xf32>
    %68 = vector.shape_cast %67 : vector<8xf32> to vector<8x1xf32>
    %69 = vector.broadcast %68 : vector<8x1xf32> to vector<8x100xf32>
    %70 = arith.subf %66, %69 : vector<8x100xf32>
    %71 = math.exp %70 : vector<8x100xf32>
    %cst_25 = arith.constant dense<0.000000e+00> : vector<8xf32>
    %72 = vector.multi_reduction <add>, %71, %cst_25 [1] : vector<8x100xf32> to vector<8xf32>
    %73 = vector.shape_cast %72 : vector<8xf32> to vector<8x1xf32>
    %cst_26 = arith.constant 1.000000e-01 : f32
    %74 = vector.broadcast %cst_26 : f32 to vector<8x1xf32>
    %75 = arith.mulf %73, %74 : vector<8x1xf32>
    %76 = tpu.reciprocal %75 {approx = true} : vector<8x1xf32> -> vector<8x1xf32>
    %77 = vector.broadcast %76 : vector<8x1xf32> to vector<8x100xf32>
    %78 = arith.mulf %71, %77 : vector<8x100xf32>
    %cst_27 = arith.constant dense<0.000000e+00> : vector<8x100xf32>
    %79 = tpu.matmul %61, %4, %cst_27 {dimension_numbers = #tpu.dot_dimension_numbers<[1], [0], [0], [1], [0, 0, 1, 1], [], []>} : vector<8x100xf32>, vector<100x100xf32>, vector<8x100xf32> -> vector<8x100xf32>
    %80 = arith.mulf %79, %78 : vector<8x100xf32>
    %81 = vector.extract_strided_slice %0 {offsets = [0, 4, 0], sizes = [8, 1, 16], strides = [1, 1, 1]} : vector<8x8x16xf32> to vector<8x1x16xf32>
    %82 = vector.shape_cast %81 : vector<8x1x16xf32> to vector<8x16xf32>
    %cst_28 = arith.constant dense<0.000000e+00> : vector<8x100xf32>
    %83 = tpu.matmul %82, %1, %cst_28 {dimension_numbers = #tpu.dot_dimension_numbers<[1], [0], [0], [1], [0, 0, 1, 1], [], []>} : vector<8x16xf32>, vector<16x100xf32>, vector<8x100xf32> -> vector<8x100xf32>
    %84 = vector.broadcast %2 : vector<1x100xf32> to vector<8x100xf32>
    %85 = arith.addf %83, %84 : vector<8x100xf32>
    %cst_29 = arith.constant dense<0xFF800000> : vector<8xf32>
    %86 = vector.multi_reduction <maximumf>, %85, %cst_29 [1] : vector<8x100xf32> to vector<8xf32>
    %87 = vector.shape_cast %86 : vector<8xf32> to vector<8x1xf32>
    %88 = vector.broadcast %87 : vector<8x1xf32> to vector<8x100xf32>
    %89 = arith.subf %85, %88 : vector<8x100xf32>
    %90 = math.exp %89 : vector<8x100xf32>
    %cst_30 = arith.constant dense<0.000000e+00> : vector<8xf32>
    %91 = vector.multi_reduction <add>, %90, %cst_30 [1] : vector<8x100xf32> to vector<8xf32>
    %92 = vector.shape_cast %91 : vector<8xf32> to vector<8x1xf32>
    %cst_31 = arith.constant 1.000000e-01 : f32
    %93 = vector.broadcast %cst_31 : f32 to vector<8x1xf32>
    %94 = arith.mulf %92, %93 : vector<8x1xf32>
    %95 = tpu.reciprocal %94 {approx = true} : vector<8x1xf32> -> vector<8x1xf32>
    %96 = vector.broadcast %95 : vector<8x1xf32> to vector<8x100xf32>
    %97 = arith.mulf %90, %96 : vector<8x100xf32>
    %cst_32 = arith.constant dense<0.000000e+00> : vector<8x100xf32>
    %98 = tpu.matmul %80, %4, %cst_32 {dimension_numbers = #tpu.dot_dimension_numbers<[1], [0], [0], [1], [0, 0, 1, 1], [], []>} : vector<8x100xf32>, vector<100x100xf32>, vector<8x100xf32> -> vector<8x100xf32>
    %99 = arith.mulf %98, %97 : vector<8x100xf32>
    %100 = vector.extract_strided_slice %0 {offsets = [0, 5, 0], sizes = [8, 1, 16], strides = [1, 1, 1]} : vector<8x8x16xf32> to vector<8x1x16xf32>
    %101 = vector.shape_cast %100 : vector<8x1x16xf32> to vector<8x16xf32>
    %cst_33 = arith.constant dense<0.000000e+00> : vector<8x100xf32>
    %102 = tpu.matmul %101, %1, %cst_33 {dimension_numbers = #tpu.dot_dimension_numbers<[1], [0], [0], [1], [0, 0, 1, 1], [], []>} : vector<8x16xf32>, vector<16x100xf32>, vector<8x100xf32> -> vector<8x100xf32>
    %103 = vector.broadcast %2 : vector<1x100xf32> to vector<8x100xf32>
    %104 = arith.addf %102, %103 : vector<8x100xf32>
    %cst_34 = arith.constant dense<0xFF800000> : vector<8xf32>
    %105 = vector.multi_reduction <maximumf>, %104, %cst_34 [1] : vector<8x100xf32> to vector<8xf32>
    %106 = vector.shape_cast %105 : vector<8xf32> to vector<8x1xf32>
    %107 = vector.broadcast %106 : vector<8x1xf32> to vector<8x100xf32>
    %108 = arith.subf %104, %107 : vector<8x100xf32>
    %109 = math.exp %108 : vector<8x100xf32>
    %cst_35 = arith.constant dense<0.000000e+00> : vector<8xf32>
    %110 = vector.multi_reduction <add>, %109, %cst_35 [1] : vector<8x100xf32> to vector<8xf32>
    %111 = vector.shape_cast %110 : vector<8xf32> to vector<8x1xf32>
    %cst_36 = arith.constant 1.000000e-01 : f32
    %112 = vector.broadcast %cst_36 : f32 to vector<8x1xf32>
    %113 = arith.mulf %111, %112 : vector<8x1xf32>
    %114 = tpu.reciprocal %113 {approx = true} : vector<8x1xf32> -> vector<8x1xf32>
    %115 = vector.broadcast %114 : vector<8x1xf32> to vector<8x100xf32>
    %116 = arith.mulf %109, %115 : vector<8x100xf32>
    %cst_37 = arith.constant dense<0.000000e+00> : vector<8x100xf32>
    %117 = tpu.matmul %99, %4, %cst_37 {dimension_numbers = #tpu.dot_dimension_numbers<[1], [0], [0], [1], [0, 0, 1, 1], [], []>} : vector<8x100xf32>, vector<100x100xf32>, vector<8x100xf32> -> vector<8x100xf32>
    %118 = arith.mulf %117, %116 : vector<8x100xf32>
    %119 = vector.extract_strided_slice %0 {offsets = [0, 6, 0], sizes = [8, 1, 16], strides = [1, 1, 1]} : vector<8x8x16xf32> to vector<8x1x16xf32>
    %120 = vector.shape_cast %119 : vector<8x1x16xf32> to vector<8x16xf32>
    %cst_38 = arith.constant dense<0.000000e+00> : vector<8x100xf32>
    %121 = tpu.matmul %120, %1, %cst_38 {dimension_numbers = #tpu.dot_dimension_numbers<[1], [0], [0], [1], [0, 0, 1, 1], [], []>} : vector<8x16xf32>, vector<16x100xf32>, vector<8x100xf32> -> vector<8x100xf32>
    %122 = vector.broadcast %2 : vector<1x100xf32> to vector<8x100xf32>
    %123 = arith.addf %121, %122 : vector<8x100xf32>
    %cst_39 = arith.constant dense<0xFF800000> : vector<8xf32>
    %124 = vector.multi_reduction <maximumf>, %123, %cst_39 [1] : vector<8x100xf32> to vector<8xf32>
    %125 = vector.shape_cast %124 : vector<8xf32> to vector<8x1xf32>
    %126 = vector.broadcast %125 : vector<8x1xf32> to vector<8x100xf32>
    %127 = arith.subf %123, %126 : vector<8x100xf32>
    %128 = math.exp %127 : vector<8x100xf32>
    %cst_40 = arith.constant dense<0.000000e+00> : vector<8xf32>
    %129 = vector.multi_reduction <add>, %128, %cst_40 [1] : vector<8x100xf32> to vector<8xf32>
    %130 = vector.shape_cast %129 : vector<8xf32> to vector<8x1xf32>
    %cst_41 = arith.constant 1.000000e-01 : f32
    %131 = vector.broadcast %cst_41 : f32 to vector<8x1xf32>
    %132 = arith.mulf %130, %131 : vector<8x1xf32>
    %133 = tpu.reciprocal %132 {approx = true} : vector<8x1xf32> -> vector<8x1xf32>
    %134 = vector.broadcast %133 : vector<8x1xf32> to vector<8x100xf32>
    %135 = arith.mulf %128, %134 : vector<8x100xf32>
    %cst_42 = arith.constant dense<0.000000e+00> : vector<8x100xf32>
    %136 = tpu.matmul %118, %4, %cst_42 {dimension_numbers = #tpu.dot_dimension_numbers<[1], [0], [0], [1], [0, 0, 1, 1], [], []>} : vector<8x100xf32>, vector<100x100xf32>, vector<8x100xf32> -> vector<8x100xf32>
    %137 = arith.mulf %136, %135 : vector<8x100xf32>
    %138 = vector.extract_strided_slice %0 {offsets = [0, 7, 0], sizes = [8, 1, 16], strides = [1, 1, 1]} : vector<8x8x16xf32> to vector<8x1x16xf32>
    %139 = vector.shape_cast %138 : vector<8x1x16xf32> to vector<8x16xf32>
    %cst_43 = arith.constant dense<0.000000e+00> : vector<8x100xf32>
    %140 = tpu.matmul %139, %1, %cst_43 {dimension_numbers = #tpu.dot_dimension_numbers<[1], [0], [0], [1], [0, 0, 1, 1], [], []>} : vector<8x16xf32>, vector<16x100xf32>, vector<8x100xf32> -> vector<8x100xf32>
    %141 = vector.broadcast %2 : vector<1x100xf32> to vector<8x100xf32>
    %142 = arith.addf %140, %141 : vector<8x100xf32>
    %cst_44 = arith.constant dense<0xFF800000> : vector<8xf32>
    %143 = vector.multi_reduction <maximumf>, %142, %cst_44 [1] : vector<8x100xf32> to vector<8xf32>
    %144 = vector.shape_cast %143 : vector<8xf32> to vector<8x1xf32>
    %145 = vector.broadcast %144 : vector<8x1xf32> to vector<8x100xf32>
    %146 = arith.subf %142, %145 : vector<8x100xf32>
    %147 = math.exp %146 : vector<8x100xf32>
    %cst_45 = arith.constant dense<0.000000e+00> : vector<8xf32>
    %148 = vector.multi_reduction <add>, %147, %cst_45 [1] : vector<8x100xf32> to vector<8xf32>
    %149 = vector.shape_cast %148 : vector<8xf32> to vector<8x1xf32>
    %cst_46 = arith.constant 1.000000e-01 : f32
    %150 = vector.broadcast %cst_46 : f32 to vector<8x1xf32>
    %151 = arith.mulf %149, %150 : vector<8x1xf32>
    %152 = tpu.reciprocal %151 {approx = true} : vector<8x1xf32> -> vector<8x1xf32>
    %153 = vector.broadcast %152 : vector<8x1xf32> to vector<8x100xf32>
    %154 = arith.mulf %147, %153 : vector<8x100xf32>
    %cst_47 = arith.constant dense<0.000000e+00> : vector<8x100xf32>
    %155 = tpu.matmul %137, %4, %cst_47 {dimension_numbers = #tpu.dot_dimension_numbers<[1], [0], [0], [1], [0, 0, 1, 1], [], []>} : vector<8x100xf32>, vector<100x100xf32>, vector<8x100xf32> -> vector<8x100xf32>
    %156 = arith.mulf %155, %154 : vector<8x100xf32>
    %c0_48 = arith.constant 0 : index
    %c0_49 = arith.constant 0 : index
    %157 = vector.load %arg6[%c0_48, %c0_49] : memref<100x128xf32, #tpu.memory_space<vmem>>, vector<100x128xf32>
    %cst_50 = arith.constant dense<0.000000e+00> : vector<8x128xf32>
    %158 = tpu.matmul %156, %157, %cst_50 {dimension_numbers = #tpu.dot_dimension_numbers<[1], [0], [0], [1], [0, 0, 1, 1], [], []>} : vector<8x100xf32>, vector<100x128xf32>, vector<8x128xf32> -> vector<8x128xf32>
    %c0_51 = arith.constant 0 : index
    %c0_52 = arith.constant 0 : index
    %159 = vector.load %arg7[%c0_51, %c0_52] : memref<8x128xf32, #tpu.memory_space<vmem>>, vector<8x128xf32>
    tpu.vector_store %arg7[%c0_51, %c0_52], %158 {strides = array<i32>} : memref<8x128xf32, #tpu.memory_space<vmem>>, vector<8x128xf32>,
    return
  }
  func.func @transform_0(%arg0: i32) -> (i32, i32, i32) {
    %c0_i32 = arith.constant 0 : i32
    %c0_i32_0 = arith.constant 0 : i32
    %c0_i32_1 = arith.constant 0 : i32
    return %arg0, %c0_i32, %c0_i32_0 : i32, i32, i32
  }
  func.func @transform_1(%arg0: i32) -> (i32, i32) {
    %c0_i32 = arith.constant 0 : i32
    %c0_i32_0 = arith.constant 0 : i32
    %c0_i32_1 = arith.constant 0 : i32
    return %c0_i32, %c0_i32_0 : i32, i32
  }
  func.func @transform_2(%arg0: i32) -> (i32, i32) {
    %c0_i32 = arith.constant 0 : i32
    %c0_i32_0 = arith.constant 0 : i32
    %c0_i32_1 = arith.constant 0 : i32
    return %c0_i32, %c0_i32_0 : i32, i32
  }
  func.func @transform_3(%arg0: i32) -> (i32, i32) {
    %c0_i32 = arith.constant 0 : i32
    %c0_i32_0 = arith.constant 0 : i32
    %c0_i32_1 = arith.constant 0 : i32
    return %c0_i32, %c0_i32_0 : i32, i32
  }
  func.func @transform_4(%arg0: i32) -> (i32, i32) {
    %c0_i32 = arith.constant 0 : i32
    %c0_i32_0 = arith.constant 0 : i32
    %c0_i32_1 = arith.constant 0 : i32
    return %c0_i32, %c0_i32_0 : i32, i32
  }
  func.func @transform_5(%arg0: i32) -> (i32, i32) {
    %c0_i32 = arith.constant 0 : i32
    %c0_i32_0 = arith.constant 0 : i32
    %c0_i32_1 = arith.constant 0 : i32
    return %c0_i32, %c0_i32_0 : i32, i32
  }
  func.func @transform_6(%arg0: i32) -> (i32, i32) {
    %c0_i32 = arith.constant 0 : i32
    %c0_i32_0 = arith.constant 0 : i32
    return %arg0, %c0_i32 : i32, i32
  }
}

</mosaic_0001>

<llo_original>
// kernel: fsa_forward.1
$region0: #{fsa_forward.1}
  #allocation0 [shape = 'u32[]', space=smem, size = 0x4, offset = 0x4, fixed_abs, tag = 'smem constant byte address 0x4 - core index']
  #allocation1 [shape = 'u32[144,128]{1,0:T(1,128)}', space=vmem, size = 0x12000, scoped, tag = 'internal scratch']
  %s0 = inlined_call_operand.vmem [shape: f32[8,8,16], index: 0, kind: input, shape index: {}]
  %s1 = inlined_call_operand.vmem [shape: f32[16,100], index: 1, kind: input, shape index: {}]
  %s2 = inlined_call_operand.vmem [shape: f32[1,100], index: 2, kind: input, shape index: {}]
  %s3 = inlined_call_operand.vmem [shape: f32[1,100], index: 3, kind: input, shape index: {}]
  %s4 = inlined_call_operand.hbm [shape: f32[100,100], index: 4, kind: input, shape index: {}]
  %s5 = inlined_call_operand.hbm [shape: f32[100,128], index: 5, kind: input, shape index: {}]
  %s6 = inlined_call_operand.vmem [shape: f32[8,128], index: 6, kind: output, shape index: {}]
  %s7 = sld [smem:[#allocation0]]
  $region42: #{fsa_forward.1} parent=0
    _
  %s9 = ssub.s32 1, %s7
  %s10 = scalar_select 0, %s9, %s7
  $region1: #{fsa_forward.1} parent=0
    #allocation2 [shape = 'u8[53248]{0}', space=vmem, size = 0xd000, scoped, tag = 'input window, operand 4, single buffered']
    #allocation3 [shape = 's32[1]{0}', space=sflag, size = 0x4, scoped, tag = 'scoped memory for fsa_forward.1']
    #allocation4 [shape = 'u8[53248]{0}', space=vmem, size = 0xd000, scoped, tag = 'input window, operand 5, single buffered']
    #allocation5 [shape = 's32[1]{0}', space=sflag, size = 0x4, scoped, tag = 'scoped memory for fsa_forward.1']
    %11 = vsyncpa [#allocation3], 0
    %12 = vsyncpa [#allocation5], 0
    // Predicated region
    $region2: #{fsa_forward.1} parent=1 // pred_check
      _
    $region3: #{fsa_forward.1} parent=1 // pred_check_branch
      %14 = sbr.rel (0) target = $region5
    $region4: #{fsa_forward.1} parent=1 // pred_region
      _
    $region5: #{fsa_forward.1} parent=1 // pred_fallthru
      _
    // Predicated region
    $region6: #{fsa_forward.1} parent=1 // pred_check
      _
    $region7: #{fsa_forward.1} parent=1 // pred_check_branch
      %16 = sbr.rel (0) target = $region9
    $region8: #{fsa_forward.1} parent=1 // pred_region
      _
    $region9: #{fsa_forward.1} parent=1 // pred_fallthru
      _
    // Predicated region
    $region10: #{fsa_forward.1} parent=1 // pred_check
      _
    $region11: #{fsa_forward.1} parent=1 // pred_check_branch
      %18 = sbr.rel (0) target = $region13
    $region12: #{fsa_forward.1} parent=1 // pred_region
      _
    $region13: #{fsa_forward.1} parent=1 // pred_fallthru
      _
    // Predicated region
    $region14: #{fsa_forward.1} parent=1 // pred_check
      _
    $region15: #{fsa_forward.1} parent=1 // pred_check_branch
      %20 = sbr.rel (0) target = $region17
    $region16: #{fsa_forward.1} parent=1 // pred_region
      _
    $region17: #{fsa_forward.1} parent=1 // pred_fallthru
      _
    // Predicated region
    $region18: #{fsa_forward.1} parent=1 // pred_check
      _
    $region19: #{fsa_forward.1} parent=1 // pred_check_branch
      %22 = sbr.rel (0) target = $region21
    $region20: #{fsa_forward.1} parent=1 // pred_region
      %s24 = ssub.s32 1664, 1664
      %25 = vsyncadd [#allocation3], %s24
      %s26 = sshll.u32 [#allocation2], 4
      %s27 = int_to_ptr.vmem [resolvable:$true] %s26
      %32 = dma.hbm_to_vmem [thread:$0]  %s4, 1664, %s27, [#allocation3], 128, 128, 8
    $region21: #{fsa_forward.1} parent=1 // pred_fallthru
      _
    // Predicated region
    $region22: #{fsa_forward.1} parent=1 // pred_check
      _
    $region23: #{fsa_forward.1} parent=1 // pred_check_branch
      %34 = sbr.rel (0) target = $region25
    $region24: #{fsa_forward.1} parent=1 // pred_region
      %s36 = ssub.s32 1664, 1664
      %37 = vsyncadd [#allocation5], %s36
      %s38 = sshll.u32 [#allocation4], 4
      %s39 = int_to_ptr.vmem [resolvable:$true] %s38
      %44 = dma.hbm_to_vmem [thread:$0]  %s5, 1664, %s39, [#allocation5], 128, 128, 8
    $region25: #{fsa_forward.1} parent=1 // pred_fallthru
      _
    // Predicated region
    $region26: #{fsa_forward.1} parent=1 // pred_check
      _
    $region27: #{fsa_forward.1} parent=1 // pred_check_branch
      %46 = sbr.rel (0) target = $region29
    $region28: #{fsa_forward.1} parent=1 // pred_region
      %47 = dma.done [#allocation3], 1664
    $region29: #{fsa_forward.1} parent=1 // pred_fallthru
      _
    // Predicated region
    $region30: #{fsa_forward.1} parent=1 // pred_check
      _
    $region31: #{fsa_forward.1} parent=1 // pred_check_branch
      %49 = sbr.rel (0) target = $region33
    $region32: #{fsa_forward.1} parent=1 // pred_region
      %50 = dma.done [#allocation5], 1664
    $region33: #{fsa_forward.1} parent=1 // pred_fallthru
      _
    %v51 = vld [vmem:[%s0] sm:$0xff]
    %v52 = vld [vmem:[%s0 + $0x8] sm:$0xff]
    %v53 = vld [vmem:[%s0 + $0x10] sm:$0xff]
    %v54 = vld [vmem:[%s0 + $0x18] sm:$0xff]
    %v55 = vld [vmem:[%s0 + $0x20] sm:$0xff]
    %v56 = vld [vmem:[%s0 + $0x28] sm:$0xff]
    %v57 = vld [vmem:[%s0 + $0x30] sm:$0xff]
    %v58 = vld [vmem:[%s0 + $0x38] sm:$0xff]
    %v59 = vld [vmem:[%s1] sm:$0xff]
    %v60 = vld [vmem:[%s1 + $0x8] sm:$0xff]
    %v61 = vld [vmem:[%s2] sm:$0x1]
    %v62 = vld [vmem:[%s3] sm:$0x1]
    %v63 = vld [vmem:[#allocation2] sm:$0xff]
    %v64 = vld [vmem:[#allocation2 + $0x8] sm:$0xff]
    %v65 = vld [vmem:[#allocation2 + $0x10] sm:$0xff]
    %v66 = vld [vmem:[#allocation2 + $0x18] sm:$0xff]
    %v67 = vld [vmem:[#allocation2 + $0x20] sm:$0xff]
    %v68 = vld [vmem:[#allocation2 + $0x28] sm:$0xff]
    %v69 = vld [vmem:[#allocation2 + $0x30] sm:$0xff]
    %v70 = vld [vmem:[#allocation2 + $0x38] sm:$0xff]
    %v71 = vld [vmem:[#allocation2 + $0x40] sm:$0xff]
    %v72 = vld [vmem:[#allocation2 + $0x48] sm:$0xff]
    %v73 = vld [vmem:[#allocation2 + $0x50] sm:$0xff]
    %v74 = vld [vmem:[#allocation2 + $0x58] sm:$0xff]
    %v75 = vld [vmem:[#allocation2 + $0x60] sm:$0xf]
    %v77 = vlaneseq
    %v78 = vshrl.u32 %v77, 7
    %v79 = vsub.s32 0, %v78
    %v80 = vrot.slane %v61, %v79
    %v90 = vrot.slane %v52, 7
    %vm91 = vcmask 1041409
    %v92 = vsel %vm91, %v90, %v51
    %v93 = vrot.slane %v53, 6
    %vm94 = vcmask 1042434
    %v95 = vsel %vm94, %v93, %v92
    %v96 = vrot.slane %v54, 5
    %vm97 = vcmask 1043459
    %v98 = vsel %vm97, %v96, %v95
    %v99 = vrot.slane %v55, 4
    %vm100 = vcmask 1044484
    %v101 = vsel %vm100, %v99, %v98
    %v102 = vrot.slane %v56, 3
    %vm103 = vcmask 1045509
    %v104 = vsel %vm103, %v102, %v101
    %v105 = vrot.slane %v57, 2
    %vm106 = vcmask 1046534
    %v107 = vsel %vm106, %v105, %v104
    %v108 = vrot.slane %v58, 1
    %vm109 = vcmask 1047559
    %v110 = vsel %vm109, %v108, %v107
    %vm111 = vcmask 130048
    %v112 = vsel %vm111, %v110, 0
    %114 = vmatprep.subr.mxu0 0.0
    %115 = vmatpush1.msra.mxu0 %v59
    %116 = vmatprep.subr.mxu0 0.0
    %117 = vmatpush1.msra.mxu0 %v60
    %118 = vmatprep.subr.mxu0 0.0
    %119 = vmatpush1.msra.mxu0 0.0
    %120 = vmatprep.subr.mxu0 0.0
    %121 = vmatpush1.msra.mxu0 0.0
    %122 = vmatprep.subr.mxu0 0.0
    %123 = vmatpush1.msra.mxu0 0.0
    %124 = vmatprep.subr.mxu0 0.0
    %125 = vmatpush1.msra.mxu0 0.0
    %126 = vmatprep.subr.mxu0 0.0
    %127 = vmatpush1.msra.mxu0 0.0
    %128 = vmatprep.subr.mxu0 0.0
    %129 = vmatpush1.msra.mxu0 0.0
    %130 = vmatprep.subr.mxu0 0.0
    %131 = vmatpush1.msra.mxu0 0.0
    %132 = vmatprep.subr.mxu0 0.0
    %133 = vmatpush1.msra.mxu0 0.0
    %134 = vmatprep.subr.mxu0 0.0
    %135 = vmatpush1.msra.mxu0 0.0
    %136 = vmatprep.subr.mxu0 0.0
    %137 = vmatpush1.msra.mxu0 0.0
    %138 = vmatprep.subr.mxu0 0.0
    %139 = vmatpush1.msra.mxu0 0.0
    %140 = vmatprep.subr.mxu0 0.0
    %141 = vmatpush1.msra.mxu0 0.0
    %142 = vmatprep.subr.mxu0 0.0
    %143 = vmatpush1.msra.mxu0 0.0
    %144 = vmatprep.subr.mxu0 0.0
    %145 = vmatpush1.msra.mxu0 0.0
    %146 = vmatprep.subr.mxu0 0.0
    %147 = vmatpush1.msra.mxu0 0.0
    %148 = vmatprep.subr.mxu0 0.0
    %149 = vmatpush1.msra.mxu0 0.0
    %150 = vmatprep.subr.mxu0 0.0
    %151 = vmatpush1.msra.mxu0 0.0
    %152 = vmatprep.subr.mxu0 0.0
    %153 = vmatpush1.msra.mxu0 0.0
    %154 = vmatprep.subr.mxu0 0.0
    %155 = vmatpush1.msra.mxu0 0.0
    %156 = vmatprep.subr.mxu0 0.0
    %157 = vmatpush1.msra.mxu0 0.0
    %158 = vmatprep.subr.mxu0 0.0
    %159 = vmatpush1.msra.mxu0 0.0
    %160 = vmatprep.subr.mxu0 0.0
    %161 = vmatpush1.msra.mxu0 0.0
    %162 = vmatprep.subr.mxu0 0.0
    %163 = vmatpush1.msra.mxu0 0.0
    %164 = vmatprep.subr.mxu0 0.0
    %165 = vmatpush1.msra.mxu0 0.0
    %166 = vmatprep.subr.mxu0 0.0
    %167 = vmatpush1.msra.mxu0 0.0
    %168 = vmatprep.subr.mxu0 0.0
    %169 = vmatpush1.msra.mxu0 0.0
    %170 = vmatprep.subr.mxu0 0.0
    %171 = vmatpush1.msra.mxu0 0.0
    %172 = vmatprep.subr.mxu0 0.0
    %173 = vmatpush1.msra.mxu0 0.0
    %174 = vmatprep.subr.mxu0 0.0
    %175 = vmatpush1.msra.mxu0 0.0
    %176 = vmatprep.subr.mxu0 0.0
    %177 = vmatpush1.msra.mxu0 0.0
    %178 = vmatprep.mubr.f32.mxu0 0.0
    %179 = vmatmul.mubr.f32.gmra.mrb[0].mxu0 %v112
    %v180 = vpop.f32.mrb[0].mxu0
    %v181 = vadd.f32 %v80, %v180
    %v182 = vpop.f32.mrb[0].mxu0
    %183 = vdwg.mxu0
    %vm184 = vcmask 818176
    %v185 = vsel %vm184, %v181, -inf
    %186 = vmax.xlane.f32.xlu0 %v185
    %v187 = vpop.xlane.xlu0 %186
    %v188 = vsub.f32 %v181, %v187
    %v189 = vmul.f32 %v188, 1.442695
    %v190 = vpow.pop %v189
    %v191 = vsel %vm184, %v190, 0.0
    %192 = vadd.xlane.f32.xlu0 %v191
    %v193 = vpop.xlane.xlu0 %192
    %v194 = vmul.f32 %v193, 0.1
    %v195 = vrcp.pop %v194
    %v196 = vmul.f32 %v190, %v195
    %v198 = vlaneseq
    %v199 = vshrl.u32 %v198, 7
    %v200 = vsub.s32 0, %v199
    %v201 = vrot.slane %v62, %v200
    %v203 = vmul.f32 %v201, %v196
    %v204 = vrot.slane %v51, 1
    %v205 = vsel %vm91, %v52, %v204
    %v206 = vrot.slane %v53, 7
    %v207 = vsel %vm94, %v206, %v205
    %v208 = vrot.slane %v54, 6
    %v209 = vsel %vm97, %v208, %v207
    %v210 = vrot.slane %v55, 5
    %v211 = vsel %vm100, %v210, %v209
    %v212 = vrot.slane %v56, 4
    %v213 = vsel %vm103, %v212, %v211
    %v214 = vrot.slane %v57, 3
    %v215 = vsel %vm106, %v214, %v213
    %v216 = vrot.slane %v58, 2
    %v217 = vsel %vm109, %v216, %v215
    %v218 = vsel %vm111, %v217, 0
    %220 = vmatprep.subr.mxu0 0.0
    %221 = vmatpush1.msra.mxu0 %v59
    %222 = vmatprep.subr.mxu0 0.0
    %223 = vmatpush1.msra.mxu0 %v60
    %224 = vmatprep.subr.mxu0 0.0
    %225 = vmatpush1.msra.mxu0 0.0
    %226 = vmatprep.subr.mxu0 0.0
    %227 = vmatpush1.msra.mxu0 0.0
    %228 = vmatprep.subr.mxu0 0.0
    %229 = vmatpush1.msra.mxu0 0.0
    %230 = vmatprep.subr.mxu0 0.0
    %231 = vmatpush1.msra.mxu0 0.0
    %232 = vmatprep.subr.mxu0 0.0
    %233 = vmatpush1.msra.mxu0 0.0
    %234 = vmatprep.subr.mxu0 0.0
    %235 = vmatpush1.msra.mxu0 0.0
    %236 = vmatprep.subr.mxu0 0.0
    %237 = vmatpush1.msra.mxu0 0.0
    %238 = vmatprep.subr.mxu0 0.0
    %239 = vmatpush1.msra.mxu0 0.0
    %240 = vmatprep.subr.mxu0 0.0
    %241 = vmatpush1.msra.mxu0 0.0
    %242 = vmatprep.subr.mxu0 0.0
    %243 = vmatpush1.msra.mxu0 0.0
    %244 = vmatprep.subr.mxu0 0.0
    %245 = vmatpush1.msra.mxu0 0.0
    %246 = vmatprep.subr.mxu0 0.0
    %247 = vmatpush1.msra.mxu0 0.0
    %248 = vmatprep.subr.mxu0 0.0
    %249 = vmatpush1.msra.mxu0 0.0
    %250 = vmatprep.subr.mxu0 0.0
    %251 = vmatpush1.msra.mxu0 0.0
    %252 = vmatprep.subr.mxu0 0.0
    %253 = vmatpush1.msra.mxu0 0.0
    %254 = vmatprep.subr.mxu0 0.0
    %255 = vmatpush1.msra.mxu0 0.0
    %256 = vmatprep.subr.mxu0 0.0
    %257 = vmatpush1.msra.mxu0 0.0
    %258 = vmatprep.subr.mxu0 0.0
    %259 = vmatpush1.msra.mxu0 0.0
    %260 = vmatprep.subr.mxu0 0.0
    %261 = vmatpush1.msra.mxu0 0.0
    %262 = vmatprep.subr.mxu0 0.0
    %263 = vmatpush1.msra.mxu0 0.0
    %264 = vmatprep.subr.mxu0 0.0
    %265 = vmatpush1.msra.mxu0 0.0
    %266 = vmatprep.subr.mxu0 0.0
    %267 = vmatpush1.msra.mxu0 0.0
    %268 = vmatprep.subr.mxu0 0.0
    %269 = vmatpush1.msra.mxu0 0.0
    %270 = vmatprep.subr.mxu0 0.0
    %271 = vmatpush1.msra.mxu0 0.0
    %272 = vmatprep.subr.mxu0 0.0
    %273 = vmatpush1.msra.mxu0 0.0
    %274 = vmatprep.subr.mxu0 0.0
    %275 = vmatpush1.msra.mxu0 0.0
    %276 = vmatprep.subr.mxu0 0.0
    %277 = vmatpush1.msra.mxu0 0.0
    %278 = vmatprep.subr.mxu0 0.0
    %279 = vmatpush1.msra.mxu0 0.0
    %280 = vmatprep.subr.mxu0 0.0
    %281 = vmatpush1.msra.mxu0 0.0
    %282 = vmatprep.subr.mxu0 0.0
    %283 = vmatpush1.msra.mxu0 0.0
    %284 = vmatprep.mubr.f32.mxu0 0.0
    %285 = vmatmul.mubr.f32.gmra.mrb[0].mxu0 %v218
    %v286 = vpop.f32.mrb[0].mxu0
    %v287 = vadd.f32 %v80, %v286
    %v288 = vpop.f32.mrb[0].mxu0
    %289 = vdwg.mxu0
    %v290 = vsel %vm184, %v287, -inf
    %291 = vmax.xlane.f32.xlu0 %v290
    %v292 = vpop.xlane.xlu0 %291
    %v293 = vsub.f32 %v287, %v292
    %v294 = vmul.f32 %v293, 1.442695
    %v295 = vpow.pop %v294
    %v296 = vsel %vm184, %v295, 0.0
    %297 = vadd.xlane.f32.xlu0 %v296
    %v298 = vpop.xlane.xlu0 %297
    %v299 = vmul.f32 %v298, 0.1
    %v300 = vrcp.pop %v299
    %v301 = vmul.f32 %v295, %v300
    %v303 = vsel %vm184, %v203, 0
    %vm305 = vcmask 1043456
    %v307 = vsel %vm305, %v75, 0
    %309 = vmatprep.subr.mxu0 0.0
    %310 = vmatpush1.msra.mxu0 %v63
    %311 = vmatprep.subr.mxu0 0.0
    %312 = vmatpush1.msra.mxu0 %v64
    %313 = vmatprep.subr.mxu0 0.0
    %314 = vmatpush1.msra.mxu0 %v65
    %315 = vmatprep.subr.mxu0 0.0
    %316 = vmatpush1.msra.mxu0 %v66
    %317 = vmatprep.subr.mxu0 0.0
    %318 = vmatpush1.msra.mxu0 %v67
    %319 = vmatprep.subr.mxu0 0.0
    %320 = vmatpush1.msra.mxu0 %v68
    %321 = vmatprep.subr.mxu0 0.0
    %322 = vmatpush1.msra.mxu0 %v69
    %323 = vmatprep.subr.mxu0 0.0
    %324 = vmatpush1.msra.mxu0 %v70
    %325 = vmatprep.subr.mxu0 0.0
    %326 = vmatpush1.msra.mxu0 %v71
    %327 = vmatprep.subr.mxu0 0.0
    %328 = vmatpush1.msra.mxu0 %v72
    %329 = vmatprep.subr.mxu0 0.0
    %330 = vmatpush1.msra.mxu0 %v73
    %331 = vmatprep.subr.mxu0 0.0
    %332 = vmatpush1.msra.mxu0 %v74
    %333 = vmatprep.subr.mxu0 0.0
    %334 = vmatpush1.msra.mxu0 %v307
    %335 = vmatprep.subr.mxu0 0.0
    %336 = vmatpush1.msra.mxu0 0.0
    %337 = vmatprep.subr.mxu0 0.0
    %338 = vmatpush1.msra.mxu0 0.0
    %339 = vmatprep.subr.mxu0 0.0
    %340 = vmatpush1.msra.mxu0 0.0
    %341 = vmatprep.subr.mxu0 0.0
    %342 = vmatpush1.msra.mxu0 0.0
    %343 = vmatprep.subr.mxu0 0.0
    %344 = vmatpush1.msra.mxu0 0.0
    %345 = vmatprep.subr.mxu0 0.0
    %346 = vmatpush1.msra.mxu0 0.0
    %347 = vmatprep.subr.mxu0 0.0
    %348 = vmatpush1.msra.mxu0 0.0
    %349 = vmatprep.subr.mxu0 0.0
    %350 = vmatpush1.msra.mxu0 0.0
    %351 = vmatprep.subr.mxu0 0.0
    %352 = vmatpush1.msra.mxu0 0.0
    %353 = vmatprep.subr.mxu0 0.0
    %354 = vmatpush1.msra.mxu0 0.0
    %355 = vmatprep.subr.mxu0 0.0
    %356 = vmatpush1.msra.mxu0 0.0
    %357 = vmatprep.subr.mxu0 0.0
    %358 = vmatpush1.msra.mxu0 0.0
    %359 = vmatprep.subr.mxu0 0.0
    %360 = vmatpush1.msra.mxu0 0.0
    %361 = vmatprep.subr.mxu0 0.0
    %362 = vmatpush1.msra.mxu0 0.0
    %363 = vmatprep.subr.mxu0 0.0
    %364 = vmatpush1.msra.mxu0 0.0
    %365 = vmatprep.subr.mxu0 0.0
    %366 = vmatpush1.msra.mxu0 0.0
    %367 = vmatprep.subr.mxu0 0.0
    %368 = vmatpush1.msra.mxu0 0.0
    %369 = vmatprep.subr.mxu0 0.0
    %370 = vmatpush1.msra.mxu0 0.0
    %371 = vmatprep.subr.mxu0 0.0
    %372 = vmatpush1.msra.mxu0 0.0
    %373 = vmatprep.mubr.f32.mxu0 0.0
    %374 = vmatmul.mubr.f32.gmra.mrb[0].mxu0 %v303
    %v375 = vpop.f32.mrb[0].mxu0
    %v376 = vadd.f32 0.0, %v375
    %v377 = vpop.f32.mrb[0].mxu0
    %378 = vdwg.mxu0
    %v379 = vmul.f32 %v376, %v301
    %v380 = vrot.slane %v51, 2
    %v381 = vrot.slane %v52, 1
    %v382 = vsel %vm91, %v381, %v380
    %v383 = vsel %vm94, %v53, %v382
    %v384 = vrot.slane %v54, 7
    %v385 = vsel %vm97, %v384, %v383
    %v386 = vrot.slane %v55, 6
    %v387 = vsel %vm100, %v386, %v385
    %v388 = vrot.slane %v56, 5
    %v389 = vsel %vm103, %v388, %v387
    %v390 = vrot.slane %v57, 4
    %v391 = vsel %vm106, %v390, %v389
    %v392 = vrot.slane %v58, 3
    %v393 = vsel %vm109, %v392, %v391
    %v394 = vsel %vm111, %v393, 0
    %396 = vmatprep.subr.mxu0 0.0
    %397 = vmatpush1.msra.mxu0 %v59
    %398 = vmatprep.subr.mxu0 0.0
    %399 = vmatpush1.msra.mxu0 %v60
    %400 = vmatprep.subr.mxu0 0.0
    %401 = vmatpush1.msra.mxu0 0.0
    %402 = vmatprep.subr.mxu0 0.0
    %403 = vmatpush1.msra.mxu0 0.0
    %404 = vmatprep.subr.mxu0 0.0
    %405 = vmatpush1.msra.mxu0 0.0
    %406 = vmatprep.subr.mxu0 0.0
    %407 = vmatpush1.msra.mxu0 0.0
    %408 = vmatprep.subr.mxu0 0.0
    %409 = vmatpush1.msra.mxu0 0.0
    %410 = vmatprep.subr.mxu0 0.0
    %411 = vmatpush1.msra.mxu0 0.0
    %412 = vmatprep.subr.mxu0 0.0
    %413 = vmatpush1.msra.mxu0 0.0
    %414 = vmatprep.subr.mxu0 0.0
    %415 = vmatpush1.msra.mxu0 0.0
    %416 = vmatprep.subr.mxu0 0.0
    %417 = vmatpush1.msra.mxu0 0.0
    %418 = vmatprep.subr.mxu0 0.0
    %419 = vmatpush1.msra.mxu0 0.0
    %420 = vmatprep.subr.mxu0 0.0
    %421 = vmatpush1.msra.mxu0 0.0
    %422 = vmatprep.subr.mxu0 0.0
    %423 = vmatpush1.msra.mxu0 0.0
    %424 = vmatprep.subr.mxu0 0.0
    %425 = vmatpush1.msra.mxu0 0.0
    %426 = vmatprep.subr.mxu0 0.0
    %427 = vmatpush1.msra.mxu0 0.0
    %428 = vmatprep.subr.mxu0 0.0
    %429 = vmatpush1.msra.mxu0 0.0
    %430 = vmatprep.subr.mxu0 0.0
    %431 = vmatpush1.msra.mxu0 0.0
    %432 = vmatprep.subr.mxu0 0.0
    %433 = vmatpush1.msra.mxu0 0.0
    %434 = vmatprep.subr.mxu0 0.0
    %435 = vmatpush1.msra.mxu0 0.0
    %436 = vmatprep.subr.mxu0 0.0
    %437 = vmatpush1.msra.mxu0 0.0
    %438 = vmatprep.subr.mxu0 0.0
    %439 = vmatpush1.msra.mxu0 0.0
    %440 = vmatprep.subr.mxu0 0.0
    %441 = vmatpush1.msra.mxu0 0.0
    %442 = vmatprep.subr.mxu0 0.0
    %443 = vmatpush1.msra.mxu0 0.0
    %444 = vmatprep.subr.mxu0 0.0
    %445 = vmatpush1.msra.mxu0 0.0
    %446 = vmatprep.subr.mxu0 0.0
    %447 = vmatpush1.msra.mxu0 0.0
    %448 = vmatprep.subr.mxu0 0.0
    %449 = vmatpush1.msra.mxu0 0.0
    %450 = vmatprep.subr.mxu0 0.0
    %451 = vmatpush1.msra.mxu0 0.0
    %452 = vmatprep.subr.mxu0 0.0
    %453 = vmatpush1.msra.mxu0 0.0
    %454 = vmatprep.subr.mxu0 0.0
    %455 = vmatpush1.msra.mxu0 0.0
    %456 = vmatprep.subr.mxu0 0.0
    %457 = vmatpush1.msra.mxu0 0.0
    %458 = vmatprep.subr.mxu0 0.0
    %459 = vmatpush1.msra.mxu0 0.0
    %460 = vmatprep.mubr.f32.mxu0 0.0
    %461 = vmatmul.mubr.f32.gmra.mrb[0].mxu0 %v394
    %v462 = vpop.f32.mrb[0].mxu0
    %v463 = vadd.f32 %v80, %v462
    %v464 = vpop.f32.mrb[0].mxu0
    %465 = vdwg.mxu0
    %v466 = vsel %vm184, %v463, -inf
    %467 = vmax.xlane.f32.xlu0 %v466
    %v468 = vpop.xlane.xlu0 %467
    %v469 = vsub.f32 %v463, %v468
    %v470 = vmul.f32 %v469, 1.442695
    %v471 = vpow.pop %v470
    %v472 = vsel %vm184, %v471, 0.0
    %473 = vadd.xlane.f32.xlu0 %v472
    %v474 = vpop.xlane.xlu0 %473
    %v475 = vmul.f32 %v474, 0.1
    %v476 = vrcp.pop %v475
    %v477 = vmul.f32 %v471, %v476
    %v479 = vsel %vm184, %v379, 0
    %481 = vmatprep.subr.mxu0 0.0
    %482 = vmatpush1.msra.mxu0 %v63
    %483 = vmatprep.subr.mxu0 0.0
    %484 = vmatpush1.msra.mxu0 %v64
    %485 = vmatprep.subr.mxu0 0.0
    %486 = vmatpush1.msra.mxu0 %v65
    %487 = vmatprep.subr.mxu0 0.0
    %488 = vmatpush1.msra.mxu0 %v66
    %489 = vmatprep.subr.mxu0 0.0
    %490 = vmatpush1.msra.mxu0 %v67
    %491 = vmatprep.subr.mxu0 0.0
    %492 = vmatpush1.msra.mxu0 %v68
    %493 = vmatprep.subr.mxu0 0.0
    %494 = vmatpush1.msra.mxu0 %v69
    %495 = vmatprep.subr.mxu0 0.0
    %496 = vmatpush1.msra.mxu0 %v70
    %497 = vmatprep.subr.mxu0 0.0
    %498 = vmatpush1.msra.mxu0 %v71
    %499 = vmatprep.subr.mxu0 0.0
    %500 = vmatpush1.msra.mxu0 %v72
    %501 = vmatprep.subr.mxu0 0.0
    %502 = vmatpush1.msra.mxu0 %v73
    %503 = vmatprep.subr.mxu0 0.0
    %504 = vmatpush1.msra.mxu0 %v74
    %505 = vmatprep.subr.mxu0 0.0
    %506 = vmatpush1.msra.mxu0 %v307
    %507 = vmatprep.subr.mxu0 0.0
    %508 = vmatpush1.msra.mxu0 0.0
    %509 = vmatprep.subr.mxu0 0.0
    %510 = vmatpush1.msra.mxu0 0.0
    %511 = vmatprep.subr.mxu0 0.0
    %512 = vmatpush1.msra.mxu0 0.0
    %513 = vmatprep.subr.mxu0 0.0
    %514 = vmatpush1.msra.mxu0 0.0
    %515 = vmatprep.subr.mxu0 0.0
    %516 = vmatpush1.msra.mxu0 0.0
    %517 = vmatprep.subr.mxu0 0.0
    %518 = vmatpush1.msra.mxu0 0.0
    %519 = vmatprep.subr.mxu0 0.0
    %520 = vmatpush1.msra.mxu0 0.0
    %521 = vmatprep.subr.mxu0 0.0
    %522 = vmatpush1.msra.mxu0 0.0
    %523 = vmatprep.subr.mxu0 0.0
    %524 = vmatpush1.msra.mxu0 0.0
    %525 = vmatprep.subr.mxu0 0.0
    %526 = vmatpush1.msra.mxu0 0.0
    %527 = vmatprep.subr.mxu0 0.0
    %528 = vmatpush1.msra.mxu0 0.0
    %529 = vmatprep.subr.mxu0 0.0
    %530 = vmatpush1.msra.mxu0 0.0
    %531 = vmatprep.subr.mxu0 0.0
    %532 = vmatpush1.msra.mxu0 0.0
    %533 = vmatprep.subr.mxu0 0.0
    %534 = vmatpush1.msra.mxu0 0.0
    %535 = vmatprep.subr.mxu0 0.0
    %536 = vmatpush1.msra.mxu0 0.0
    %537 = vmatprep.subr.mxu0 0.0
    %538 = vmatpush1.msra.mxu0 0.0
    %539 = vmatprep.subr.mxu0 0.0
    %540 = vmatpush1.msra.mxu0 0.0
    %541 = vmatprep.subr.mxu0 0.0
    %542 = vmatpush1.msra.mxu0 0.0
    %543 = vmatprep.subr.mxu0 0.0
    %544 = vmatpush1.msra.mxu0 0.0
    %545 = vmatprep.mubr.f32.mxu0 0.0
    %546 = vmatmul.mubr.f32.gmra.mrb[0].mxu0 %v479
    %v547 = vpop.f32.mrb[0].mxu0
    %v548 = vadd.f32 0.0, %v547
    %v549 = vpop.f32.mrb[0].mxu0
    %550 = vdwg.mxu0
    %v551 = vmul.f32 %v548, %v477
    %v552 = vrot.slane %v51, 3
    %v553 = vrot.slane %v52, 2
    %v554 = vsel %vm91, %v553, %v552
    %v555 = vrot.slane %v53, 1
    %v556 = vsel %vm94, %v555, %v554
    %v557 = vsel %vm97, %v54, %v556
    %v558 = vrot.slane %v55, 7
    %v559 = vsel %vm100, %v558, %v557
    %v560 = vrot.slane %v56, 6
    %v561 = vsel %vm103, %v560, %v559
    %v562 = vrot.slane %v57, 5
    %v563 = vsel %vm106, %v562, %v561
    %v564 = vrot.slane %v58, 4
    %v565 = vsel %vm109, %v564, %v563
    %v566 = vsel %vm111, %v565, 0
    %568 = vmatprep.subr.mxu0 0.0
    %569 = vmatpush1.msra.mxu0 %v59
    %570 = vmatprep.subr.mxu0 0.0
    %571 = vmatpush1.msra.mxu0 %v60
    %572 = vmatprep.subr.mxu0 0.0
    %573 = vmatpush1.msra.mxu0 0.0
    %574 = vmatprep.subr.mxu0 0.0
    %575 = vmatpush1.msra.mxu0 0.0
    %576 = vmatprep.subr.mxu0 0.0
    %577 = vmatpush1.msra.mxu0 0.0
    %578 = vmatprep.subr.mxu0 0.0
    %579 = vmatpush1.msra.mxu0 0.0
    %580 = vmatprep.subr.mxu0 0.0
    %581 = vmatpush1.msra.mxu0 0.0
    %582 = vmatprep.subr.mxu0 0.0
    %583 = vmatpush1.msra.mxu0 0.0
    %584 = vmatprep.subr.mxu0 0.0
    %585 = vmatpush1.msra.mxu0 0.0
    %586 = vmatprep.subr.mxu0 0.0
    %587 = vmatpush1.msra.mxu0 0.0
    %588 = vmatprep.subr.mxu0 0.0
    %589 = vmatpush1.msra.mxu0 0.0
    %590 = vmatprep.subr.mxu0 0.0
    %591 = vmatpush1.msra.mxu0 0.0
    %592 = vmatprep.subr.mxu0 0.0
    %593 = vmatpush1.msra.mxu0 0.0
    %594 = vmatprep.subr.mxu0 0.0
    %595 = vmatpush1.msra.mxu0 0.0
    %596 = vmatprep.subr.mxu0 0.0
    %597 = vmatpush1.msra.mxu0 0.0
    %598 = vmatprep.subr.mxu0 0.0
    %599 = vmatpush1.msra.mxu0 0.0
    %600 = vmatprep.subr.mxu0 0.0
    %601 = vmatpush1.msra.mxu0 0.0
    %602 = vmatprep.subr.mxu0 0.0
    %603 = vmatpush1.msra.mxu0 0.0
    %604 = vmatprep.subr.mxu0 0.0
    %605 = vmatpush1.msra.mxu0 0.0
    %606 = vmatprep.subr.mxu0 0.0
    %607 = vmatpush1.msra.mxu0 0.0
    %608 = vmatprep.subr.mxu0 0.0
    %609 = vmatpush1.msra.mxu0 0.0
    %610 = vmatprep.subr.mxu0 0.0
    %611 = vmatpush1.msra.mxu0 0.0
    %612 = vmatprep.subr.mxu0 0.0
    %613 = vmatpush1.msra.mxu0 0.0
    %614 = vmatprep.subr.mxu0 0.0
    %615 = vmatpush1.msra.mxu0 0.0
    %616 = vmatprep.subr.mxu0 0.0
    %617 = vmatpush1.msra.mxu0 0.0
    %618 = vmatprep.subr.mxu0 0.0
    %619 = vmatpush1.msra.mxu0 0.0
    %620 = vmatprep.subr.mxu0 0.0
    %621 = vmatpush1.msra.mxu0 0.0
    %622 = vmatprep.subr.mxu0 0.0
    %623 = vmatpush1.msra.mxu0 0.0
    %624 = vmatprep.subr.mxu0 0.0
    %625 = vmatpush1.msra.mxu0 0.0
    %626 = vmatprep.subr.mxu0 0.0
    %627 = vmatpush1.msra.mxu0 0.0
    %628 = vmatprep.subr.mxu0 0.0
    %629 = vmatpush1.msra.mxu0 0.0
    %630 = vmatprep.subr.mxu0 0.0
    %631 = vmatpush1.msra.mxu0 0.0
    %632 = vmatprep.mubr.f32.mxu0 0.0
    %633 = vmatmul.mubr.f32.gmra.mrb[0].mxu0 %v566
    %v634 = vpop.f32.mrb[0].mxu0
    %v635 = vadd.f32 %v80, %v634
    %v636 = vpop.f32.mrb[0].mxu0
    %637 = vdwg.mxu0
    %v638 = vsel %vm184, %v635, -inf
    %639 = vmax.xlane.f32.xlu0 %v638
    %v640 = vpop.xlane.xlu0 %639
    %v641 = vsub.f32 %v635, %v640
    %v642 = vmul.f32 %v641, 1.442695
    %v643 = vpow.pop %v642
    %v644 = vsel %vm184, %v643, 0.0
    %645 = vadd.xlane.f32.xlu0 %v644
    %v646 = vpop.xlane.xlu0 %645
    %v647 = vmul.f32 %v646, 0.1
    %v648 = vrcp.pop %v647
    %v649 = vmul.f32 %v643, %v648
    %v651 = vsel %vm184, %v551, 0
    %653 = vmatprep.subr.mxu0 0.0
    %654 = vmatpush1.msra.mxu0 %v63
    %655 = vmatprep.subr.mxu0 0.0
    %656 = vmatpush1.msra.mxu0 %v64
    %657 = vmatprep.subr.mxu0 0.0
    %658 = vmatpush1.msra.mxu0 %v65
    %659 = vmatprep.subr.mxu0 0.0
    %660 = vmatpush1.msra.mxu0 %v66
    %661 = vmatprep.subr.mxu0 0.0
    %662 = vmatpush1.msra.mxu0 %v67
    %663 = vmatprep.subr.mxu0 0.0
    %664 = vmatpush1.msra.mxu0 %v68
    %665 = vmatprep.subr.mxu0 0.0
    %666 = vmatpush1.msra.mxu0 %v69
    %667 = vmatprep.subr.mxu0 0.0
    %668 = vmatpush1.msra.mxu0 %v70
    %669 = vmatprep.subr.mxu0 0.0
    %670 = vmatpush1.msra.mxu0 %v71
    %671 = vmatprep.subr.mxu0 0.0
    %672 = vmatpush1.msra.mxu0 %v72
    %673 = vmatprep.subr.mxu0 0.0
    %674 = vmatpush1.msra.mxu0 %v73
    %675 = vmatprep.subr.mxu0 0.0
    %676 = vmatpush1.msra.mxu0 %v74
    %677 = vmatprep.subr.mxu0 0.0
    %678 = vmatpush1.msra.mxu0 %v307
    %679 = vmatprep.subr.mxu0 0.0
    %680 = vmatpush1.msra.mxu0 0.0
    %681 = vmatprep.subr.mxu0 0.0
    %682 = vmatpush1.msra.mxu0 0.0
    %683 = vmatprep.subr.mxu0 0.0
    %684 = vmatpush1.msra.mxu0 0.0
    %685 = vmatprep.subr.mxu0 0.0
    %686 = vmatpush1.msra.mxu0 0.0
    %687 = vmatprep.subr.mxu0 0.0
    %688 = vmatpush1.msra.mxu0 0.0
    %689 = vmatprep.subr.mxu0 0.0
    %690 = vmatpush1.msra.mxu0 0.0
    %691 = vmatprep.subr.mxu0 0.0
    %692 = vmatpush1.msra.mxu0 0.0
    %693 = vmatprep.subr.mxu0 0.0
    %694 = vmatpush1.msra.mxu0 0.0
    %695 = vmatprep.subr.mxu0 0.0
    %696 = vmatpush1.msra.mxu0 0.0
    %697 = vmatprep.subr.mxu0 0.0
    %698 = vmatpush1.msra.mxu0 0.0
    %699 = vmatprep.subr.mxu0 0.0
    %700 = vmatpush1.msra.mxu0 0.0
    %701 = vmatprep.subr.mxu0 0.0
    %702 = vmatpush1.msra.mxu0 0.0
    %703 = vmatprep.subr.mxu0 0.0
    %704 = vmatpush1.msra.mxu0 0.0
    %705 = vmatprep.subr.mxu0 0.0
    %706 = vmatpush1.msra.mxu0 0.0
    %707 = vmatprep.subr.mxu0 0.0
    %708 = vmatpush1.msra.mxu0 0.0
    %709 = vmatprep.subr.mxu0 0.0
    %710 = vmatpush1.msra.mxu0 0.0
    %711 = vmatprep.subr.mxu0 0.0
    %712 = vmatpush1.msra.mxu0 0.0
    %713 = vmatprep.subr.mxu0 0.0
    %714 = vmatpush1.msra.mxu0 0.0
    %715 = vmatprep.subr.mxu0 0.0
    %716 = vmatpush1.msra.mxu0 0.0
    %717 = vmatprep.mubr.f32.mxu0 0.0
    %718 = vmatmul.mubr.f32.gmra.mrb[0].mxu0 %v651
    %v719 = vpop.f32.mrb[0].mxu0
    %v720 = vadd.f32 0.0, %v719
    %v721 = vpop.f32.mrb[0].mxu0
    %722 = vdwg.mxu0
    %v723 = vmul.f32 %v720, %v649
    %v724 = vrot.slane %v51, 4
    %v725 = vrot.slane %v52, 3
    %v726 = vsel %vm91, %v725, %v724
    %v727 = vrot.slane %v53, 2
    %v728 = vsel %vm94, %v727, %v726
    %v729 = vrot.slane %v54, 1
    %v730 = vsel %vm97, %v729, %v728
    %v731 = vsel %vm100, %v55, %v730
    %v732 = vrot.slane %v56, 7
    %v733 = vsel %vm103, %v732, %v731
    %v734 = vrot.slane %v57, 6
    %v735 = vsel %vm106, %v734, %v733
    %v736 = vrot.slane %v58, 5
    %v737 = vsel %vm109, %v736, %v735
    %v738 = vsel %vm111, %v737, 0
    %740 = vmatprep.subr.mxu0 0.0
    %741 = vmatpush1.msra.mxu0 %v59
    %742 = vmatprep.subr.mxu0 0.0
    %743 = vmatpush1.msra.mxu0 %v60
    %744 = vmatprep.subr.mxu0 0.0
    %745 = vmatpush1.msra.mxu0 0.0
    %746 = vmatprep.subr.mxu0 0.0
    %747 = vmatpush1.msra.mxu0 0.0
    %748 = vmatprep.subr.mxu0 0.0
    %749 = vmatpush1.msra.mxu0 0.0
    %750 = vmatprep.subr.mxu0 0.0
    %751 = vmatpush1.msra.mxu0 0.0
    %752 = vmatprep.subr.mxu0 0.0
    %753 = vmatpush1.msra.mxu0 0.0
    %754 = vmatprep.subr.mxu0 0.0
    %755 = vmatpush1.msra.mxu0 0.0
    %756 = vmatprep.subr.mxu0 0.0
    %757 = vmatpush1.msra.mxu0 0.0
    %758 = vmatprep.subr.mxu0 0.0
    %759 = vmatpush1.msra.mxu0 0.0
    %760 = vmatprep.subr.mxu0 0.0
    %761 = vmatpush1.msra.mxu0 0.0
    %762 = vmatprep.subr.mxu0 0.0
    %763 = vmatpush1.msra.mxu0 0.0
    %764 = vmatprep.subr.mxu0 0.0
    %765 = vmatpush1.msra.mxu0 0.0
    %766 = vmatprep.subr.mxu0 0.0
    %767 = vmatpush1.msra.mxu0 0.0
    %768 = vmatprep.subr.mxu0 0.0
    %769 = vmatpush1.msra.mxu0 0.0
    %770 = vmatprep.subr.mxu0 0.0
    %771 = vmatpush1.msra.mxu0 0.0
    %772 = vmatprep.subr.mxu0 0.0
    %773 = vmatpush1.msra.mxu0 0.0
    %774 = vmatprep.subr.mxu0 0.0
    %775 = vmatpush1.msra.mxu0 0.0
    %776 = vmatprep.subr.mxu0 0.0
    %777 = vmatpush1.msra.mxu0 0.0
    %778 = vmatprep.subr.mxu0 0.0
    %779 = vmatpush1.msra.mxu0 0.0
    %780 = vmatprep.subr.mxu0 0.0
    %781 = vmatpush1.msra.mxu0 0.0
    %782 = vmatprep.subr.mxu0 0.0
    %783 = vmatpush1.msra.mxu0 0.0
    %784 = vmatprep.subr.mxu0 0.0
    %785 = vmatpush1.msra.mxu0 0.0
    %786 = vmatprep.subr.mxu0 0.0
    %787 = vmatpush1.msra.mxu0 0.0
    %788 = vmatprep.subr.mxu0 0.0
    %789 = vmatpush1.msra.mxu0 0.0
    %790 = vmatprep.subr.mxu0 0.0
    %791 = vmatpush1.msra.mxu0 0.0
    %792 = vmatprep.subr.mxu0 0.0
    %793 = vmatpush1.msra.mxu0 0.0
    %794 = vmatprep.subr.mxu0 0.0
    %795 = vmatpush1.msra.mxu0 0.0
    %796 = vmatprep.subr.mxu0 0.0
    %797 = vmatpush1.msra.mxu0 0.0
    %798 = vmatprep.subr.mxu0 0.0
    %799 = vmatpush1.msra.mxu0 0.0
    %800 = vmatprep.subr.mxu0 0.0
    %801 = vmatpush1.msra.mxu0 0.0
    %802 = vmatprep.subr.mxu0 0.0
    %803 = vmatpush1.msra.mxu0 0.0
    %804 = vmatprep.mubr.f32.mxu0 0.0
    %805 = vmatmul.mubr.f32.gmra.mrb[0].mxu0 %v738
    %v806 = vpop.f32.mrb[0].mxu0
    %v807 = vadd.f32 %v80, %v806
    %v808 = vpop.f32.mrb[0].mxu0
    %809 = vdwg.mxu0
    %v810 = vsel %vm184, %v807, -inf
    %811 = vmax.xlane.f32.xlu0 %v810
    %v812 = vpop.xlane.xlu0 %811
    %v813 = vsub.f32 %v807, %v812
    %v814 = vmul.f32 %v813, 1.442695
    %v815 = vpow.pop %v814
    %v816 = vsel %vm184, %v815, 0.0
    %817 = vadd.xlane.f32.xlu0 %v816
    %v818 = vpop.xlane.xlu0 %817
    %v819 = vmul.f32 %v818, 0.1
    %v820 = vrcp.pop %v819
    %v821 = vmul.f32 %v815, %v820
    %v823 = vsel %vm184, %v723, 0
    %825 = vmatprep.subr.mxu0 0.0
    %826 = vmatpush1.msra.mxu0 %v63
    %827 = vmatprep.subr.mxu0 0.0
    %828 = vmatpush1.msra.mxu0 %v64
    %829 = vmatprep.subr.mxu0 0.0
    %830 = vmatpush1.msra.mxu0 %v65
    %831 = vmatprep.subr.mxu0 0.0
    %832 = vmatpush1.msra.mxu0 %v66
    %833 = vmatprep.subr.mxu0 0.0
    %834 = vmatpush1.msra.mxu0 %v67
    %835 = vmatprep.subr.mxu0 0.0
    %836 = vmatpush1.msra.mxu0 %v68
    %837 = vmatprep.subr.mxu0 0.0
    %838 = vmatpush1.msra.mxu0 %v69
    %839 = vmatprep.subr.mxu0 0.0
    %840 = vmatpush1.msra.mxu0 %v70
    %841 = vmatprep.subr.mxu0 0.0
    %842 = vmatpush1.msra.mxu0 %v71
    %843 = vmatprep.subr.mxu0 0.0
    %844 = vmatpush1.msra.mxu0 %v72
    %845 = vmatprep.subr.mxu0 0.0
    %846 = vmatpush1.msra.mxu0 %v73
    %847 = vmatprep.subr.mxu0 0.0
    %848 = vmatpush1.msra.mxu0 %v74
    %849 = vmatprep.subr.mxu0 0.0
    %850 = vmatpush1.msra.mxu0 %v307
    %851 = vmatprep.subr.mxu0 0.0
    %852 = vmatpush1.msra.mxu0 0.0
    %853 = vmatprep.subr.mxu0 0.0
    %854 = vmatpush1.msra.mxu0 0.0
    %855 = vmatprep.subr.mxu0 0.0
    %856 = vmatpush1.msra.mxu0 0.0
    %857 = vmatprep.subr.mxu0 0.0
    %858 = vmatpush1.msra.mxu0 0.0
    %859 = vmatprep.subr.mxu0 0.0
    %860 = vmatpush1.msra.mxu0 0.0
    %861 = vmatprep.subr.mxu0 0.0
    %862 = vmatpush1.msra.mxu0 0.0
    %863 = vmatprep.subr.mxu0 0.0
    %864 = vmatpush1.msra.mxu0 0.0
    %865 = vmatprep.subr.mxu0 0.0
    %866 = vmatpush1.msra.mxu0 0.0
    %867 = vmatprep.subr.mxu0 0.0
    %868 = vmatpush1.msra.mxu0 0.0
    %869 = vmatprep.subr.mxu0 0.0
    %870 = vmatpush1.msra.mxu0 0.0
    %871 = vmatprep.subr.mxu0 0.0
    %872 = vmatpush1.msra.mxu0 0.0
    %873 = vmatprep.subr.mxu0 0.0
    %874 = vmatpush1.msra.mxu0 0.0
    %875 = vmatprep.subr.mxu0 0.0
    %876 = vmatpush1.msra.mxu0 0.0
    %877 = vmatprep.subr.mxu0 0.0
    %878 = vmatpush1.msra.mxu0 0.0
    %879 = vmatprep.subr.mxu0 0.0
    %880 = vmatpush1.msra.mxu0 0.0
    %881 = vmatprep.subr.mxu0 0.0
    %882 = vmatpush1.msra.mxu0 0.0
    %883 = vmatprep.subr.mxu0 0.0
    %884 = vmatpush1.msra.mxu0 0.0
    %885 = vmatprep.subr.mxu0 0.0
    %886 = vmatpush1.msra.mxu0 0.0
    %887 = vmatprep.subr.mxu0 0.0
    %888 = vmatpush1.msra.mxu0 0.0
    %889 = vmatprep.mubr.f32.mxu0 0.0
    %890 = vmatmul.mubr.f32.gmra.mrb[0].mxu0 %v823
    %v891 = vpop.f32.mrb[0].mxu0
    %v892 = vadd.f32 0.0, %v891
    %v893 = vpop.f32.mrb[0].mxu0
    %894 = vdwg.mxu0
    %v895 = vmul.f32 %v892, %v821
    %v896 = vrot.slane %v51, 5
    %v897 = vrot.slane %v52, 4
    %v898 = vsel %vm91, %v897, %v896
    %v899 = vrot.slane %v53, 3
    %v900 = vsel %vm94, %v899, %v898
    %v901 = vrot.slane %v54, 2
    %v902 = vsel %vm97, %v901, %v900
    %v903 = vrot.slane %v55, 1
    %v904 = vsel %vm100, %v903, %v902
    %v905 = vsel %vm103, %v56, %v904
    %v906 = vrot.slane %v57, 7
    %v907 = vsel %vm106, %v906, %v905
    %v908 = vrot.slane %v58, 6
    %v909 = vsel %vm109, %v908, %v907
    %v910 = vsel %vm111, %v909, 0
    %912 = vmatprep.subr.mxu0 0.0
    %913 = vmatpush1.msra.mxu0 %v59
    %914 = vmatprep.subr.mxu0 0.0
    %915 = vmatpush1.msra.mxu0 %v60
    %916 = vmatprep.subr.mxu0 0.0
    %917 = vmatpush1.msra.mxu0 0.0
    %918 = vmatprep.subr.mxu0 0.0
    %919 = vmatpush1.msra.mxu0 0.0
    %920 = vmatprep.subr.mxu0 0.0
    %921 = vmatpush1.msra.mxu0 0.0
    %922 = vmatprep.subr.mxu0 0.0
    %923 = vmatpush1.msra.mxu0 0.0
    %924 = vmatprep.subr.mxu0 0.0
    %925 = vmatpush1.msra.mxu0 0.0
    %926 = vmatprep.subr.mxu0 0.0
    %927 = vmatpush1.msra.mxu0 0.0
    %928 = vmatprep.subr.mxu0 0.0
    %929 = vmatpush1.msra.mxu0 0.0
    %930 = vmatprep.subr.mxu0 0.0
    %931 = vmatpush1.msra.mxu0 0.0
    %932 = vmatprep.subr.mxu0 0.0
    %933 = vmatpush1.msra.mxu0 0.0
    %934 = vmatprep.subr.mxu0 0.0
    %935 = vmatpush1.msra.mxu0 0.0
    %936 = vmatprep.subr.mxu0 0.0
    %937 = vmatpush1.msra.mxu0 0.0
    %938 = vmatprep.subr.mxu0 0.0
    %939 = vmatpush1.msra.mxu0 0.0
    %940 = vmatprep.subr.mxu0 0.0
    %941 = vmatpush1.msra.mxu0 0.0
    %942 = vmatprep.subr.mxu0 0.0
    %943 = vmatpush1.msra.mxu0 0.0
    %944 = vmatprep.subr.mxu0 0.0
    %945 = vmatpush1.msra.mxu0 0.0
    %946 = vmatprep.subr.mxu0 0.0
    %947 = vmatpush1.msra.mxu0 0.0
    %948 = vmatprep.subr.mxu0 0.0
    %949 = vmatpush1.msra.mxu0 0.0
    %950 = vmatprep.subr.mxu0 0.0
    %951 = vmatpush1.msra.mxu0 0.0
    %952 = vmatprep.subr.mxu0 0.0
    %953 = vmatpush1.msra.mxu0 0.0
    %954 = vmatprep.subr.mxu0 0.0
    %955 = vmatpush1.msra.mxu0 0.0
    %956 = vmatprep.subr.mxu0 0.0
    %957 = vmatpush1.msra.mxu0 0.0
    %958 = vmatprep.subr.mxu0 0.0
    %959 = vmatpush1.msra.mxu0 0.0
    %960 = vmatprep.subr.mxu0 0.0
    %961 = vmatpush1.msra.mxu0 0.0
    %962 = vmatprep.subr.mxu0 0.0
    %963 = vmatpush1.msra.mxu0 0.0
    %964 = vmatprep.subr.mxu0 0.0
    %965 = vmatpush1.msra.mxu0 0.0
    %966 = vmatprep.subr.mxu0 0.0
    %967 = vmatpush1.msra.mxu0 0.0
    %968 = vmatprep.subr.mxu0 0.0
    %969 = vmatpush1.msra.mxu0 0.0
    %970 = vmatprep.subr.mxu0 0.0
    %971 = vmatpush1.msra.mxu0 0.0
    %972 = vmatprep.subr.mxu0 0.0
    %973 = vmatpush1.msra.mxu0 0.0
    %974 = vmatprep.subr.mxu0 0.0
    %975 = vmatpush1.msra.mxu0 0.0
    %976 = vmatprep.mubr.f32.mxu0 0.0
    %977 = vmatmul.mubr.f32.gmra.mrb[0].mxu0 %v910
    %v978 = vpop.f32.mrb[0].mxu0
    %v979 = vadd.f32 %v80, %v978
    %v980 = vpop.f32.mrb[0].mxu0
    %981 = vdwg.mxu0
    %v982 = vsel %vm184, %v979, -inf
    %983 = vmax.xlane.f32.xlu0 %v982
    %v984 = vpop.xlane.xlu0 %983
    %v985 = vsub.f32 %v979, %v984
    %v986 = vmul.f32 %v985, 1.442695
    %v987 = vpow.pop %v986
    %v988 = vsel %vm184, %v987, 0.0
    %989 = vadd.xlane.f32.xlu0 %v988
    %v990 = vpop.xlane.xlu0 %989
    %v991 = vmul.f32 %v990, 0.1
    %v992 = vrcp.pop %v991
    %v993 = vmul.f32 %v987, %v992
    %v995 = vsel %vm184, %v895, 0
    %997 = vmatprep.subr.mxu0 0.0
    %998 = vmatpush1.msra.mxu0 %v63
    %999 = vmatprep.subr.mxu0 0.0
    %1000 = vmatpush1.msra.mxu0 %v64
    %1001 = vmatprep.subr.mxu0 0.0
    %1002 = vmatpush1.msra.mxu0 %v65
    %1003 = vmatprep.subr.mxu0 0.0
    %1004 = vmatpush1.msra.mxu0 %v66
    %1005 = vmatprep.subr.mxu0 0.0
    %1006 = vmatpush1.msra.mxu0 %v67
    %1007 = vmatprep.subr.mxu0 0.0
    %1008 = vmatpush1.msra.mxu0 %v68
    %1009 = vmatprep.subr.mxu0 0.0
    %1010 = vmatpush1.msra.mxu0 %v69
    %1011 = vmatprep.subr.mxu0 0.0
    %1012 = vmatpush1.msra.mxu0 %v70
    %1013 = vmatprep.subr.mxu0 0.0
    %1014 = vmatpush1.msra.mxu0 %v71
    %1015 = vmatprep.subr.mxu0 0.0
    %1016 = vmatpush1.msra.mxu0 %v72
    %1017 = vmatprep.subr.mxu0 0.0
    %1018 = vmatpush1.msra.mxu0 %v73
    %1019 = vmatprep.subr.mxu0 0.0
    %1020 = vmatpush1.msra.mxu0 %v74
    %1021 = vmatprep.subr.mxu0 0.0
    %1022 = vmatpush1.msra.mxu0 %v307
    %1023 = vmatprep.subr.mxu0 0.0
    %1024 = vmatpush1.msra.mxu0 0.0
    %1025 = vmatprep.subr.mxu0 0.0
    %1026 = vmatpush1.msra.mxu0 0.0
    %1027 = vmatprep.subr.mxu0 0.0
    %1028 = vmatpush1.msra.mxu0 0.0
    %1029 = vmatprep.subr.mxu0 0.0
    %1030 = vmatpush1.msra.mxu0 0.0
    %1031 = vmatprep.subr.mxu0 0.0
    %1032 = vmatpush1.msra.mxu0 0.0
    %1033 = vmatprep.subr.mxu0 0.0
    %1034 = vmatpush1.msra.mxu0 0.0
    %1035 = vmatprep.subr.mxu0 0.0
    %1036 = vmatpush1.msra.mxu0 0.0
    %1037 = vmatprep.subr.mxu0 0.0
    %1038 = vmatpush1.msra.mxu0 0.0
    %1039 = vmatprep.subr.mxu0 0.0
    %1040 = vmatpush1.msra.mxu0 0.0
    %1041 = vmatprep.subr.mxu0 0.0
    %1042 = vmatpush1.msra.mxu0 0.0
    %1043 = vmatprep.subr.mxu0 0.0
    %1044 = vmatpush1.msra.mxu0 0.0
    %1045 = vmatprep.subr.mxu0 0.0
    %1046 = vmatpush1.msra.mxu0 0.0
    %1047 = vmatprep.subr.mxu0 0.0
    %1048 = vmatpush1.msra.mxu0 0.0
    %1049 = vmatprep.subr.mxu0 0.0
    %1050 = vmatpush1.msra.mxu0 0.0
    %1051 = vmatprep.subr.mxu0 0.0
    %1052 = vmatpush1.msra.mxu0 0.0
    %1053 = vmatprep.subr.mxu0 0.0
    %1054 = vmatpush1.msra.mxu0 0.0
    %1055 = vmatprep.subr.mxu0 0.0
    %1056 = vmatpush1.msra.mxu0 0.0
    %1057 = vmatprep.subr.mxu0 0.0
    %1058 = vmatpush1.msra.mxu0 0.0
    %1059 = vmatprep.subr.mxu0 0.0
    %1060 = vmatpush1.msra.mxu0 0.0
    %1061 = vmatprep.mubr.f32.mxu0 0.0
    %1062 = vmatmul.mubr.f32.gmra.mrb[0].mxu0 %v995
    %v1063 = vpop.f32.mrb[0].mxu0
    %v1064 = vadd.f32 0.0, %v1063
    %v1065 = vpop.f32.mrb[0].mxu0
    %1066 = vdwg.mxu0
    %v1067 = vmul.f32 %v1064, %v993
    %v1068 = vrot.slane %v51, 6
    %v1069 = vrot.slane %v52, 5
    %v1070 = vsel %vm91, %v1069, %v1068
    %v1071 = vrot.slane %v53, 4
    %v1072 = vsel %vm94, %v1071, %v1070
    %v1073 = vrot.slane %v54, 3
    %v1074 = vsel %vm97, %v1073, %v1072
    %v1075 = vrot.slane %v55, 2
    %v1076 = vsel %vm100, %v1075, %v1074
    %v1077 = vrot.slane %v56, 1
    %v1078 = vsel %vm103, %v1077, %v1076
    %v1079 = vsel %vm106, %v57, %v1078
    %v1080 = vrot.slane %v58, 7
    %v1081 = vsel %vm109, %v1080, %v1079
    %v1082 = vsel %vm111, %v1081, 0
    %1084 = vmatprep.subr.mxu0 0.0
    %1085 = vmatpush1.msra.mxu0 %v59
    %1086 = vmatprep.subr.mxu0 0.0
    %1087 = vmatpush1.msra.mxu0 %v60
    %1088 = vmatprep.subr.mxu0 0.0
    %1089 = vmatpush1.msra.mxu0 0.0
    %1090 = vmatprep.subr.mxu0 0.0
    %1091 = vmatpush1.msra.mxu0 0.0
    %1092 = vmatprep.subr.mxu0 0.0
    %1093 = vmatpush1.msra.mxu0 0.0
    %1094 = vmatprep.subr.mxu0 0.0
    %1095 = vmatpush1.msra.mxu0 0.0
    %1096 = vmatprep.subr.mxu0 0.0
    %1097 = vmatpush1.msra.mxu0 0.0
    %1098 = vmatprep.subr.mxu0 0.0
    %1099 = vmatpush1.msra.mxu0 0.0
    %1100 = vmatprep.subr.mxu0 0.0
    %1101 = vmatpush1.msra.mxu0 0.0
    %1102 = vmatprep.subr.mxu0 0.0
    %1103 = vmatpush1.msra.mxu0 0.0
    %1104 = vmatprep.subr.mxu0 0.0
    %1105 = vmatpush1.msra.mxu0 0.0
    %1106 = vmatprep.subr.mxu0 0.0
    %1107 = vmatpush1.msra.mxu0 0.0
    %1108 = vmatprep.subr.mxu0 0.0
    %1109 = vmatpush1.msra.mxu0 0.0
    %1110 = vmatprep.subr.mxu0 0.0
    %1111 = vmatpush1.msra.mxu0 0.0
    %1112 = vmatprep.subr.mxu0 0.0
    %1113 = vmatpush1.msra.mxu0 0.0
    %1114 = vmatprep.subr.mxu0 0.0
    %1115 = vmatpush1.msra.mxu0 0.0
    %1116 = vmatprep.subr.mxu0 0.0
    %1117 = vmatpush1.msra.mxu0 0.0
    %1118 = vmatprep.subr.mxu0 0.0
    %1119 = vmatpush1.msra.mxu0 0.0
    %1120 = vmatprep.subr.mxu0 0.0
    %1121 = vmatpush1.msra.mxu0 0.0
    %1122 = vmatprep.subr.mxu0 0.0
    %1123 = vmatpush1.msra.mxu0 0.0
    %1124 = vmatprep.subr.mxu0 0.0
    %1125 = vmatpush1.msra.mxu0 0.0
    %1126 = vmatprep.subr.mxu0 0.0
    %1127 = vmatpush1.msra.mxu0 0.0
    %1128 = vmatprep.subr.mxu0 0.0
    %1129 = vmatpush1.msra.mxu0 0.0
    %1130 = vmatprep.subr.mxu0 0.0
    %1131 = vmatpush1.msra.mxu0 0.0
    %1132 = vmatprep.subr.mxu0 0.0
    %1133 = vmatpush1.msra.mxu0 0.0
    %1134 = vmatprep.subr.mxu0 0.0
    %1135 = vmatpush1.msra.mxu0 0.0
    %1136 = vmatprep.subr.mxu0 0.0
    %1137 = vmatpush1.msra.mxu0 0.0
    %1138 = vmatprep.subr.mxu0 0.0
    %1139 = vmatpush1.msra.mxu0 0.0
    %1140 = vmatprep.subr.mxu0 0.0
    %1141 = vmatpush1.msra.mxu0 0.0
    %1142 = vmatprep.subr.mxu0 0.0
    %1143 = vmatpush1.msra.mxu0 0.0
    %1144 = vmatprep.subr.mxu0 0.0
    %1145 = vmatpush1.msra.mxu0 0.0
    %1146 = vmatprep.subr.mxu0 0.0
    %1147 = vmatpush1.msra.mxu0 0.0
    %1148 = vmatprep.mubr.f32.mxu0 0.0
    %1149 = vmatmul.mubr.f32.gmra.mrb[0].mxu0 %v1082
    %v1150 = vpop.f32.mrb[0].mxu0
    %v1151 = vadd.f32 %v80, %v1150
    %v1152 = vpop.f32.mrb[0].mxu0
    %1153 = vdwg.mxu0
    %v1154 = vsel %vm184, %v1151, -inf
    %1155 = vmax.xlane.f32.xlu0 %v1154
    %v1156 = vpop.xlane.xlu0 %1155
    %v1157 = vsub.f32 %v1151, %v1156
    %v1158 = vmul.f32 %v1157, 1.442695
    %v1159 = vpow.pop %v1158
    %v1160 = vsel %vm184, %v1159, 0.0
    %1161 = vadd.xlane.f32.xlu0 %v1160
    %v1162 = vpop.xlane.xlu0 %1161
    %v1163 = vmul.f32 %v1162, 0.1
    %v1164 = vrcp.pop %v1163
    %v1165 = vmul.f32 %v1159, %v1164
    %v1167 = vsel %vm184, %v1067, 0
    %1169 = vmatprep.subr.mxu0 0.0
    %1170 = vmatpush1.msra.mxu0 %v63
    %1171 = vmatprep.subr.mxu0 0.0
    %1172 = vmatpush1.msra.mxu0 %v64
    %1173 = vmatprep.subr.mxu0 0.0
    %1174 = vmatpush1.msra.mxu0 %v65
    %1175 = vmatprep.subr.mxu0 0.0
    %1176 = vmatpush1.msra.mxu0 %v66
    %1177 = vmatprep.subr.mxu0 0.0
    %1178 = vmatpush1.msra.mxu0 %v67
    %1179 = vmatprep.subr.mxu0 0.0
    %1180 = vmatpush1.msra.mxu0 %v68
    %1181 = vmatprep.subr.mxu0 0.0
    %1182 = vmatpush1.msra.mxu0 %v69
    %1183 = vmatprep.subr.mxu0 0.0
    %1184 = vmatpush1.msra.mxu0 %v70
    %1185 = vmatprep.subr.mxu0 0.0
    %1186 = vmatpush1.msra.mxu0 %v71
    %1187 = vmatprep.subr.mxu0 0.0
    %1188 = vmatpush1.msra.mxu0 %v72
    %1189 = vmatprep.subr.mxu0 0.0
    %1190 = vmatpush1.msra.mxu0 %v73
    %1191 = vmatprep.subr.mxu0 0.0
    %1192 = vmatpush1.msra.mxu0 %v74
    %1193 = vmatprep.subr.mxu0 0.0
    %1194 = vmatpush1.msra.mxu0 %v307
    %1195 = vmatprep.subr.mxu0 0.0
    %1196 = vmatpush1.msra.mxu0 0.0
    %1197 = vmatprep.subr.mxu0 0.0
    %1198 = vmatpush1.msra.mxu0 0.0
    %1199 = vmatprep.subr.mxu0 0.0
    %1200 = vmatpush1.msra.mxu0 0.0
    %1201 = vmatprep.subr.mxu0 0.0
    %1202 = vmatpush1.msra.mxu0 0.0
    %1203 = vmatprep.subr.mxu0 0.0
    %1204 = vmatpush1.msra.mxu0 0.0
    %1205 = vmatprep.subr.mxu0 0.0
    %1206 = vmatpush1.msra.mxu0 0.0
    %1207 = vmatprep.subr.mxu0 0.0
    %1208 = vmatpush1.msra.mxu0 0.0
    %1209 = vmatprep.subr.mxu0 0.0
    %1210 = vmatpush1.msra.mxu0 0.0
    %1211 = vmatprep.subr.mxu0 0.0
    %1212 = vmatpush1.msra.mxu0 0.0
    %1213 = vmatprep.subr.mxu0 0.0
    %1214 = vmatpush1.msra.mxu0 0.0
    %1215 = vmatprep.subr.mxu0 0.0
    %1216 = vmatpush1.msra.mxu0 0.0
    %1217 = vmatprep.subr.mxu0 0.0
    %1218 = vmatpush1.msra.mxu0 0.0
    %1219 = vmatprep.subr.mxu0 0.0
    %1220 = vmatpush1.msra.mxu0 0.0
    %1221 = vmatprep.subr.mxu0 0.0
    %1222 = vmatpush1.msra.mxu0 0.0
    %1223 = vmatprep.subr.mxu0 0.0
    %1224 = vmatpush1.msra.mxu0 0.0
    %1225 = vmatprep.subr.mxu0 0.0
    %1226 = vmatpush1.msra.mxu0 0.0
    %1227 = vmatprep.subr.mxu0 0.0
    %1228 = vmatpush1.msra.mxu0 0.0
    %1229 = vmatprep.subr.mxu0 0.0
    %1230 = vmatpush1.msra.mxu0 0.0
    %1231 = vmatprep.subr.mxu0 0.0
    %1232 = vmatpush1.msra.mxu0 0.0
    %1233 = vmatprep.mubr.f32.mxu0 0.0
    %1234 = vmatmul.mubr.f32.gmra.mrb[0].mxu0 %v1167
    %v1235 = vpop.f32.mrb[0].mxu0
    %v1236 = vadd.f32 0.0, %v1235
    %v1237 = vpop.f32.mrb[0].mxu0
    %1238 = vdwg.mxu0
    %v1239 = vmul.f32 %v1236, %v1165
    %v1240 = vrot.slane %v51, 7
    %v1241 = vrot.slane %v52, 6
    %v1242 = vsel %vm91, %v1241, %v1240
    %v1243 = vrot.slane %v53, 5
    %v1244 = vsel %vm94, %v1243, %v1242
    %v1245 = vrot.slane %v54, 4
    %v1246 = vsel %vm97, %v1245, %v1244
    %v1247 = vrot.slane %v55, 3
    %v1248 = vsel %vm100, %v1247, %v1246
    %v1249 = vrot.slane %v56, 2
    %v1250 = vsel %vm103, %v1249, %v1248
    %v1251 = vrot.slane %v57, 1
    %v1252 = vsel %vm106, %v1251, %v1250
    %v1253 = vsel %vm109, %v58, %v1252
    %v1254 = vsel %vm111, %v1253, 0
    %1256 = vmatprep.subr.mxu0 0.0
    %1257 = vmatpush1.msra.mxu0 %v59
    %1258 = vmatprep.subr.mxu0 0.0
    %1259 = vmatpush1.msra.mxu0 %v60
    %1260 = vmatprep.subr.mxu0 0.0
    %1261 = vmatpush1.msra.mxu0 0.0
    %1262 = vmatprep.subr.mxu0 0.0
    %1263 = vmatpush1.msra.mxu0 0.0
    %1264 = vmatprep.subr.mxu0 0.0
    %1265 = vmatpush1.msra.mxu0 0.0
    %1266 = vmatprep.subr.mxu0 0.0
    %1267 = vmatpush1.msra.mxu0 0.0
    %1268 = vmatprep.subr.mxu0 0.0
    %1269 = vmatpush1.msra.mxu0 0.0
    %1270 = vmatprep.subr.mxu0 0.0
    %1271 = vmatpush1.msra.mxu0 0.0
    %1272 = vmatprep.subr.mxu0 0.0
    %1273 = vmatpush1.msra.mxu0 0.0
    %1274 = vmatprep.subr.mxu0 0.0
    %1275 = vmatpush1.msra.mxu0 0.0
    %1276 = vmatprep.subr.mxu0 0.0
    %1277 = vmatpush1.msra.mxu0 0.0
    %1278 = vmatprep.subr.mxu0 0.0
    %1279 = vmatpush1.msra.mxu0 0.0
    %1280 = vmatprep.subr.mxu0 0.0
    %1281 = vmatpush1.msra.mxu0 0.0
    %1282 = vmatprep.subr.mxu0 0.0
    %1283 = vmatpush1.msra.mxu0 0.0
    %1284 = vmatprep.subr.mxu0 0.0
    %1285 = vmatpush1.msra.mxu0 0.0
    %1286 = vmatprep.subr.mxu0 0.0
    %1287 = vmatpush1.msra.mxu0 0.0
    %1288 = vmatprep.subr.mxu0 0.0
    %1289 = vmatpush1.msra.mxu0 0.0
    %1290 = vmatprep.subr.mxu0 0.0
    %1291 = vmatpush1.msra.mxu0 0.0
    %1292 = vmatprep.subr.mxu0 0.0
    %1293 = vmatpush1.msra.mxu0 0.0
    %1294 = vmatprep.subr.mxu0 0.0
    %1295 = vmatpush1.msra.mxu0 0.0
    %1296 = vmatprep.subr.mxu0 0.0
    %1297 = vmatpush1.msra.mxu0 0.0
    %1298 = vmatprep.subr.mxu0 0.0
    %1299 = vmatpush1.msra.mxu0 0.0
    %1300 = vmatprep.subr.mxu0 0.0
    %1301 = vmatpush1.msra.mxu0 0.0
    %1302 = vmatprep.subr.mxu0 0.0
    %1303 = vmatpush1.msra.mxu0 0.0
    %1304 = vmatprep.subr.mxu0 0.0
    %1305 = vmatpush1.msra.mxu0 0.0
    %1306 = vmatprep.subr.mxu0 0.0
    %1307 = vmatpush1.msra.mxu0 0.0
    %1308 = vmatprep.subr.mxu0 0.0
    %1309 = vmatpush1.msra.mxu0 0.0
    %1310 = vmatprep.subr.mxu0 0.0
    %1311 = vmatpush1.msra.mxu0 0.0
    %1312 = vmatprep.subr.mxu0 0.0
    %1313 = vmatpush1.msra.mxu0 0.0
    %1314 = vmatprep.subr.mxu0 0.0
    %1315 = vmatpush1.msra.mxu0 0.0
    %1316 = vmatprep.subr.mxu0 0.0
    %1317 = vmatpush1.msra.mxu0 0.0
    %1318 = vmatprep.subr.mxu0 0.0
    %1319 = vmatpush1.msra.mxu0 0.0
    %1320 = vmatprep.mubr.f32.mxu0 0.0
    %1321 = vmatmul.mubr.f32.gmra.mrb[0].mxu0 %v1254
    %v1322 = vpop.f32.mrb[0].mxu0
    %v1323 = vadd.f32 %v80, %v1322
    %v1324 = vpop.f32.mrb[0].mxu0
    %1325 = vdwg.mxu0
    %v1326 = vsel %vm184, %v1323, -inf
    %1327 = vmax.xlane.f32.xlu0 %v1326
    %v1328 = vpop.xlane.xlu0 %1327
    %v1329 = vsub.f32 %v1323, %v1328
    %v1330 = vmul.f32 %v1329, 1.442695
    %v1331 = vpow.pop %v1330
    %v1332 = vsel %vm184, %v1331, 0.0
    %1333 = vadd.xlane.f32.xlu0 %v1332
    %v1334 = vpop.xlane.xlu0 %1333
    %v1335 = vmul.f32 %v1334, 0.1
    %v1336 = vrcp.pop %v1335
    %v1337 = vmul.f32 %v1331, %v1336
    %v1339 = vsel %vm184, %v1239, 0
    %1341 = vmatprep.subr.mxu0 0.0
    %1342 = vmatpush1.msra.mxu0 %v63
    %1343 = vmatprep.subr.mxu0 0.0
    %1344 = vmatpush1.msra.mxu0 %v64
    %1345 = vmatprep.subr.mxu0 0.0
    %1346 = vmatpush1.msra.mxu0 %v65
    %1347 = vmatprep.subr.mxu0 0.0
    %1348 = vmatpush1.msra.mxu0 %v66
    %1349 = vmatprep.subr.mxu0 0.0
    %1350 = vmatpush1.msra.mxu0 %v67
    %1351 = vmatprep.subr.mxu0 0.0
    %1352 = vmatpush1.msra.mxu0 %v68
    %1353 = vmatprep.subr.mxu0 0.0
    %1354 = vmatpush1.msra.mxu0 %v69
    %1355 = vmatprep.subr.mxu0 0.0
    %1356 = vmatpush1.msra.mxu0 %v70
    %1357 = vmatprep.subr.mxu0 0.0
    %1358 = vmatpush1.msra.mxu0 %v71
    %1359 = vmatprep.subr.mxu0 0.0
    %1360 = vmatpush1.msra.mxu0 %v72
    %1361 = vmatprep.subr.mxu0 0.0
    %1362 = vmatpush1.msra.mxu0 %v73
    %1363 = vmatprep.subr.mxu0 0.0
    %1364 = vmatpush1.msra.mxu0 %v74
    %1365 = vmatprep.subr.mxu0 0.0
    %1366 = vmatpush1.msra.mxu0 %v307
    %1367 = vmatprep.subr.mxu0 0.0
    %1368 = vmatpush1.msra.mxu0 0.0
    %1369 = vmatprep.subr.mxu0 0.0
    %1370 = vmatpush1.msra.mxu0 0.0
    %1371 = vmatprep.subr.mxu0 0.0
    %1372 = vmatpush1.msra.mxu0 0.0
    %1373 = vmatprep.subr.mxu0 0.0
    %1374 = vmatpush1.msra.mxu0 0.0
    %1375 = vmatprep.subr.mxu0 0.0
    %1376 = vmatpush1.msra.mxu0 0.0
    %1377 = vmatprep.subr.mxu0 0.0
    %1378 = vmatpush1.msra.mxu0 0.0
    %1379 = vmatprep.subr.mxu0 0.0
    %1380 = vmatpush1.msra.mxu0 0.0
    %1381 = vmatprep.subr.mxu0 0.0
    %1382 = vmatpush1.msra.mxu0 0.0
    %1383 = vmatprep.subr.mxu0 0.0
    %1384 = vmatpush1.msra.mxu0 0.0
    %1385 = vmatprep.subr.mxu0 0.0
    %1386 = vmatpush1.msra.mxu0 0.0
    %1387 = vmatprep.subr.mxu0 0.0
    %1388 = vmatpush1.msra.mxu0 0.0
    %1389 = vmatprep.subr.mxu0 0.0
    %1390 = vmatpush1.msra.mxu0 0.0
    %1391 = vmatprep.subr.mxu0 0.0
    %1392 = vmatpush1.msra.mxu0 0.0
    %1393 = vmatprep.subr.mxu0 0.0
    %1394 = vmatpush1.msra.mxu0 0.0
    %1395 = vmatprep.subr.mxu0 0.0
    %1396 = vmatpush1.msra.mxu0 0.0
    %1397 = vmatprep.subr.mxu0 0.0
    %1398 = vmatpush1.msra.mxu0 0.0
    %1399 = vmatprep.subr.mxu0 0.0
    %1400 = vmatpush1.msra.mxu0 0.0
    %1401 = vmatprep.subr.mxu0 0.0
    %1402 = vmatpush1.msra.mxu0 0.0
    %1403 = vmatprep.subr.mxu0 0.0
    %1404 = vmatpush1.msra.mxu0 0.0
    %1405 = vmatprep.mubr.f32.mxu0 0.0
    %1406 = vmatmul.mubr.f32.gmra.mrb[0].mxu0 %v1339
    %v1407 = vpop.f32.mrb[0].mxu0
    %v1408 = vadd.f32 0.0, %v1407
    %v1409 = vpop.f32.mrb[0].mxu0
    %1410 = vdwg.mxu0
    %v1411 = vmul.f32 %v1408, %v1337
    %v1412 = vld [vmem:[#allocation4] sm:$0xff]
    %v1413 = vld [vmem:[#allocation4 + $0x8] sm:$0xff]
    %v1414 = vld [vmem:[#allocation4 + $0x10] sm:$0xff]
    %v1415 = vld [vmem:[#allocation4 + $0x18] sm:$0xff]
    %v1416 = vld [vmem:[#allocation4 + $0x20] sm:$0xff]
    %v1417 = vld [vmem:[#allocation4 + $0x28] sm:$0xff]
    %v1418 = vld [vmem:[#allocation4 + $0x30] sm:$0xff]
    %v1419 = vld [vmem:[#allocation4 + $0x38] sm:$0xff]
    %v1420 = vld [vmem:[#allocation4 + $0x40] sm:$0xff]
    %v1421 = vld [vmem:[#allocation4 + $0x48] sm:$0xff]
    %v1422 = vld [vmem:[#allocation4 + $0x50] sm:$0xff]
    %v1423 = vld [vmem:[#allocation4 + $0x58] sm:$0xff]
    %v1424 = vld [vmem:[#allocation4 + $0x60] sm:$0xf]
    %v1426 = vsel %vm184, %v1411, 0
    %v1429 = vsel %vm305, %v1424, 0
    %1431 = vmatprep.subr.mxu0 0.0
    %1432 = vmatpush1.msra.mxu0 %v1412
    %1433 = vmatprep.subr.mxu0 0.0
    %1434 = vmatpush1.msra.mxu0 %v1413
    %1435 = vmatprep.subr.mxu0 0.0
    %1436 = vmatpush1.msra.mxu0 %v1414
    %1437 = vmatprep.subr.mxu0 0.0
    %1438 = vmatpush1.msra.mxu0 %v1415
    %1439 = vmatprep.subr.mxu0 0.0
    %1440 = vmatpush1.msra.mxu0 %v1416
    %1441 = vmatprep.subr.mxu0 0.0
    %1442 = vmatpush1.msra.mxu0 %v1417
    %1443 = vmatprep.subr.mxu0 0.0
    %1444 = vmatpush1.msra.mxu0 %v1418
    %1445 = vmatprep.subr.mxu0 0.0
    %1446 = vmatpush1.msra.mxu0 %v1419
    %1447 = vmatprep.subr.mxu0 0.0
    %1448 = vmatpush1.msra.mxu0 %v1420
    %1449 = vmatprep.subr.mxu0 0.0
    %1450 = vmatpush1.msra.mxu0 %v1421
    %1451 = vmatprep.subr.mxu0 0.0
    %1452 = vmatpush1.msra.mxu0 %v1422
    %1453 = vmatprep.subr.mxu0 0.0
    %1454 = vmatpush1.msra.mxu0 %v1423
    %1455 = vmatprep.subr.mxu0 0.0
    %1456 = vmatpush1.msra.mxu0 %v1429
    %1457 = vmatprep.subr.mxu0 0.0
    %1458 = vmatpush1.msra.mxu0 0.0
    %1459 = vmatprep.subr.mxu0 0.0
    %1460 = vmatpush1.msra.mxu0 0.0
    %1461 = vmatprep.subr.mxu0 0.0
    %1462 = vmatpush1.msra.mxu0 0.0
    %1463 = vmatprep.subr.mxu0 0.0
    %1464 = vmatpush1.msra.mxu0 0.0
    %1465 = vmatprep.subr.mxu0 0.0
    %1466 = vmatpush1.msra.mxu0 0.0
    %1467 = vmatprep.subr.mxu0 0.0
    %1468 = vmatpush1.msra.mxu0 0.0
    %1469 = vmatprep.subr.mxu0 0.0
    %1470 = vmatpush1.msra.mxu0 0.0
    %1471 = vmatprep.subr.mxu0 0.0
    %1472 = vmatpush1.msra.mxu0 0.0
    %1473 = vmatprep.subr.mxu0 0.0
    %1474 = vmatpush1.msra.mxu0 0.0
    %1475 = vmatprep.subr.mxu0 0.0
    %1476 = vmatpush1.msra.mxu0 0.0
    %1477 = vmatprep.subr.mxu0 0.0
    %1478 = vmatpush1.msra.mxu0 0.0
    %1479 = vmatprep.subr.mxu0 0.0
    %1480 = vmatpush1.msra.mxu0 0.0
    %1481 = vmatprep.subr.mxu0 0.0
    %1482 = vmatpush1.msra.mxu0 0.0
    %1483 = vmatprep.subr.mxu0 0.0
    %1484 = vmatpush1.msra.mxu0 0.0
    %1485 = vmatprep.subr.mxu0 0.0
    %1486 = vmatpush1.msra.mxu0 0.0
    %1487 = vmatprep.subr.mxu0 0.0
    %1488 = vmatpush1.msra.mxu0 0.0
    %1489 = vmatprep.subr.mxu0 0.0
    %1490 = vmatpush1.msra.mxu0 0.0
    %1491 = vmatprep.subr.mxu0 0.0
    %1492 = vmatpush1.msra.mxu0 0.0
    %1493 = vmatprep.subr.mxu0 0.0
    %1494 = vmatpush1.msra.mxu0 0.0
    %1495 = vmatprep.mubr.f32.mxu0 0.0
    %1496 = vmatmul.mubr.f32.gmra.mrb[0].mxu0 %v1426
    %v1497 = vpop.f32.mrb[0].mxu0
    %v1498 = vadd.f32 0.0, %v1497
    %v1499 = vpop.f32.mrb[0].mxu0
    %1500 = vdwg.mxu0
    %1501 = vst [vmem:[%s6] sm:$0xff] %v1498
    // Predicated region
    $region34: #{fsa_forward.1} parent=1 // pred_check
      _
    $region35: #{fsa_forward.1} parent=1 // pred_check_branch
      %1503 = sbr.rel (0) target = $region37
    $region36: #{fsa_forward.1} parent=1 // pred_region
      _
    $region37: #{fsa_forward.1} parent=1 // pred_fallthru
      _
    // Predicated region
    $region38: #{fsa_forward.1} parent=1 // pred_check
      _
    $region39: #{fsa_forward.1} parent=1 // pred_check_branch
      %1505 = sbr.rel (0) target = $region41
    $region40: #{fsa_forward.1} parent=1 // pred_region
      _
    $region41: #{fsa_forward.1} parent=1 // pred_fallthru
      _
    %1506 = vsyncpa [#allocation3], 1
    %1507 = vsyncpa [#allocation5], 1

</llo_original>
